<compile_context>
chip_gen: v7x
topology: tpu7x:2x2x1
jax: 0.10.0
libtpu: 0.0.40
codegen_flags: <defaults>
</compile_context>

<pallas_src>
import jax
import jax.numpy as jnp
from jax.experimental import pallas as pl
from jax.experimental.pallas import tpu as pltpu


def _mlp_kernel(x_ref,
                w0_ref, b0_ref,
                w1_ref, b1_ref,
                w2_ref, b2_ref,
                w3_ref, b3_ref,
                w4_ref, b4_ref,
                w5_ref, b5_ref,
                o_ref):
    """One batch tile per grid step; activations are (NN, TILE_B)."""
    x = x_ref[...]                                             # (1, TB) f32

    # Layer 0: Linear(1 -> NN). K=1 matmul == outer product -> pure VPU.
    h = jnp.sin(w0_ref[...] * x + b0_ref[...])                 # (NN, TB)

    # Layers 1-4: Linear(NN -> NN) on the MXU, bias/sin on VPU/EUP.
    h = jnp.sin(jnp.dot(w1_ref[...], h,
                        preferred_element_type=jnp.float32) + b1_ref[...])
    h = jnp.sin(jnp.dot(w2_ref[...], h,
                        preferred_element_type=jnp.float32) + b2_ref[...])
    h = jnp.sin(jnp.dot(w3_ref[...], h,
                        preferred_element_type=jnp.float32) + b3_ref[...])
    h = jnp.sin(jnp.dot(w4_ref[...], h,
                        preferred_element_type=jnp.float32) + b4_ref[...])

    # Layer 5: Linear(NN -> 1). N=1 matmul == weighted sublane reduction
    # (VPU multiply + XLU reduce instead of an MXU round-trip).
    out = jnp.sum(w5_ref[...] * h, axis=0, keepdims=True) + b5_ref[...]  # (1, TB)
    o_ref[...] = out.astype(o_ref.dtype)


def init_params(key, nn_width):
    """PyTorch-style nn.Linear init: W is (out, in), b is (out,)."""
    dims = [(nn_width, 1), (nn_width, nn_width), (nn_width, nn_width),
            (nn_width, nn_width), (nn_width, nn_width), (1, nn_width)]
    params = []
    for (fan_out, fan_in) in dims:
        key, kw, kb = jax.random.split(key, 3)
        bound = 1.0 / jnp.sqrt(jnp.float32(fan_in))
        w = jax.random.uniform(kw, (fan_out, fan_in), jnp.float32, -bound, bound)
        b = jax.random.uniform(kb, (fan_out,), jnp.float32, -bound, bound)
        params.append((w, b))
    return params


def _auto_tile_b(batch):
    """Pick a lane-axis batch tile: multiple of 128, or the full batch."""
    if batch % 128 != 0:
        return batch                       # only legal lane-axis block is the full extent
    try:
        kind = jax.devices()[0].device_kind.lower()
        n_cores = 2 if "v7" in kind else 1  # shard grid across v7x's two TensorCores
    except Exception:
        n_cores = 1
    per_core = max(batch // n_cores, 128)
    tile = min(per_core - (per_core % 128), 2048)
    tile = max(tile, 128)
    while batch % tile != 0:
        tile -= 128
    return tile


def net_forward(x, params, *, tile_b=None):
    """x: (B, 1) float32. params: PyTorch-layout (W,b) per layer. Returns (B, 1)."""
    B = x.shape[0]
    nn_width = params[0][0].shape[0]
    if tile_b is None:
        tile_b = _auto_tile_b(B)
    assert B % tile_b == 0, "batch must be a multiple of the batch tile"

    # Host-side layout plumbing: batch on the lane axis, biases as columns,
    # output weight as a column so the kernel never transposes.
    xT = x.T                                           # (1, B)
    w0, b0 = params[0]
    w5, b5 = params[5]
    flat = [
        w0, b0.reshape(nn_width, 1),                   # (NN,1), (NN,1)
        params[1][0], params[1][1].reshape(nn_width, 1),
        params[2][0], params[2][1].reshape(nn_width, 1),
        params[3][0], params[3][1].reshape(nn_width, 1),
        params[4][0], params[4][1].reshape(nn_width, 1),
        w5.T, b5.reshape(1, 1),                        # (NN,1), (1,1)
    ]

    # Parameters are tiny (a few KiB at NN=32) and grid-invariant; full-array
    # blocks with a constant index_map. (If NN is scaled to ~1024, budget
    # vmem_limit_bytes / reduce weight buffering — not needed at this size.)
    def param_spec(shape):
        return pl.BlockSpec(shape, lambda i: (0, 0))

    in_specs = [pl.BlockSpec((1, tile_b), lambda i: (0, i))]
    for p in flat:
        in_specs.append(param_spec(p.shape))

    out_spec = pl.BlockSpec((1, tile_b), lambda i: (0, i))

    outT = pl.pallas_call(
        _mlp_kernel,
        out_shape=jax.ShapeDtypeStruct((1, B), jnp.float32),
        grid_spec=pltpu.PrefetchScalarGridSpec(
            num_scalar_prefetch=0,
            grid=(B // tile_b,),
            in_specs=in_specs,
            out_specs=out_spec,
        ),
        compiler_params=pltpu.CompilerParams(
            dimension_semantics=("parallel",)),
    )(xT, *flat)
    return outT.T                                      # back to (B, 1)


def net_forward_ref(x, params):
    """Pure-JAX reference of the PyTorch forward (PyTorch weight layout)."""
    h = x
    for li, (w, b) in enumerate(params):
        h = h @ w.T + b
        if li < len(params) - 1:
            h = jnp.sin(h)
    return h


if __name__ == "__main__":
    NN = 32          # hidden width (the module's NN)
    B = 64           # number of 1-D sample points

    key = jax.random.PRNGKey(0)
    key, kx = jax.random.split(key)
    x = jax.random.uniform(kx, (B, 1), jnp.float32, -1.0, 1.0)

    params = init_params(key, NN)

    out = net_forward(x, params)
    out = jax.block_until_ready(out)

    ref = net_forward_ref(x, params)
    assert out.shape == (B, 1)
    assert jnp.allclose(out, ref, atol=1e-5, rtol=1e-5), "mismatch vs. JAX reference"

    print("KERNEL_OK")
</pallas_src>

<mosaic_0001>
module attributes {stable_mosaic.version = 11 : i64} {
  func.func @_mlp_kernel(%arg0: i32, %arg1: memref<1x64xf32, #tpu.memory_space<vmem>>, %arg2: memref<32x1xf32, #tpu.memory_space<vmem>>, %arg3: memref<32x1xf32, #tpu.memory_space<vmem>>, %arg4: memref<32x32xf32, #tpu.memory_space<vmem>>, %arg5: memref<32x1xf32, #tpu.memory_space<vmem>>, %arg6: memref<32x32xf32, #tpu.memory_space<vmem>>, %arg7: memref<32x1xf32, #tpu.memory_space<vmem>>, %arg8: memref<32x32xf32, #tpu.memory_space<vmem>>, %arg9: memref<32x1xf32, #tpu.memory_space<vmem>>, %arg10: memref<32x32xf32, #tpu.memory_space<vmem>>, %arg11: memref<32x1xf32, #tpu.memory_space<vmem>>, %arg12: memref<32x1xf32, #tpu.memory_space<vmem>>, %arg13: memref<1x1xf32, #tpu.memory_space<vmem>>, %arg14: memref<1x64xf32, #tpu.memory_space<vmem>>) attributes {dimension_semantics = [#tpu.dimension_semantics<parallel>], iteration_bounds = array<i64: 1>, scalar_prefetch = 0 : i64, scratch_operands = 0 : i64, tpu.core_type = #tpu.core_type<tc>, window_params = [{transform_indices = @transform_0, window_bounds = array<i64: 1, 64>}, {pipeline_mode = #tpu.pipeline_mode<synchronous>, transform_indices = @transform_1, window_bounds = array<i64: 32, 1>}, {pipeline_mode = #tpu.pipeline_mode<synchronous>, transform_indices = @transform_2, window_bounds = array<i64: 32, 1>}, {pipeline_mode = #tpu.pipeline_mode<synchronous>, transform_indices = @transform_3, window_bounds = array<i64: 32, 32>}, {pipeline_mode = #tpu.pipeline_mode<synchronous>, transform_indices = @transform_4, window_bounds = array<i64: 32, 1>}, {pipeline_mode = #tpu.pipeline_mode<synchronous>, transform_indices = @transform_5, window_bounds = array<i64: 32, 32>}, {pipeline_mode = #tpu.pipeline_mode<synchronous>, transform_indices = @transform_6, window_bounds = array<i64: 32, 1>}, {pipeline_mode = #tpu.pipeline_mode<synchronous>, transform_indices = @transform_7, window_bounds = array<i64: 32, 32>}, {pipeline_mode = #tpu.pipeline_mode<synchronous>, transform_indices = @transform_8, window_bounds = array<i64: 32, 1>}, {pipeline_mode = #tpu.pipeline_mode<synchronous>, transform_indices = @transform_9, window_bounds = array<i64: 32, 32>}, {pipeline_mode = #tpu.pipeline_mode<synchronous>, transform_indices = @transform_10, window_bounds = array<i64: 32, 1>}, {pipeline_mode = #tpu.pipeline_mode<synchronous>, transform_indices = @transform_11, window_bounds = array<i64: 32, 1>}, {pipeline_mode = #tpu.pipeline_mode<synchronous>, transform_indices = @transform_12, window_bounds = array<i64: 1, 1>}, {transform_indices = @transform_13, window_bounds = array<i64: 1, 64>}]} {
    %c0 = arith.constant 0 : index
    %c0_0 = arith.constant 0 : index
    %0 = vector.load %arg1[%c0, %c0_0] : memref<1x64xf32, #tpu.memory_space<vmem>>, vector<1x64xf32>
    %c0_1 = arith.constant 0 : index
    %c0_2 = arith.constant 0 : index
    %1 = vector.load %arg2[%c0_1, %c0_2] : memref<32x1xf32, #tpu.memory_space<vmem>>, vector<32x1xf32>
    %2 = vector.broadcast %1 : vector<32x1xf32> to vector<32x64xf32>
    %3 = vector.broadcast %0 : vector<1x64xf32> to vector<32x64xf32>
    %4 = arith.mulf %2, %3 : vector<32x64xf32>
    %c0_3 = arith.constant 0 : index
    %c0_4 = arith.constant 0 : index
    %5 = vector.load %arg3[%c0_3, %c0_4] : memref<32x1xf32, #tpu.memory_space<vmem>>, vector<32x1xf32>
    %6 = vector.broadcast %5 : vector<32x1xf32> to vector<32x64xf32>
    %7 = arith.addf %4, %6 : vector<32x64xf32>
    %8 = math.sin %7 : vector<32x64xf32>
    %c0_5 = arith.constant 0 : index
    %c0_6 = arith.constant 0 : index
    %9 = vector.load %arg4[%c0_5, %c0_6] : memref<32x32xf32, #tpu.memory_space<vmem>>, vector<32x32xf32>
    %cst = arith.constant dense<0.000000e+00> : vector<32x64xf32>
    %10 = tpu.matmul %9, %8, %cst {dimension_numbers = #tpu.dot_dimension_numbers<[1], [0], [0], [1], [0, 0, 1, 1], [], []>} : vector<32x32xf32>, vector<32x64xf32>, vector<32x64xf32> -> vector<32x64xf32>
    %c0_7 = arith.constant 0 : index
    %c0_8 = arith.constant 0 : index
    %11 = vector.load %arg5[%c0_7, %c0_8] : memref<32x1xf32, #tpu.memory_space<vmem>>, vector<32x1xf32>
    %12 = vector.broadcast %11 : vector<32x1xf32> to vector<32x64xf32>
    %13 = arith.addf %10, %12 : vector<32x64xf32>
    %14 = math.sin %13 : vector<32x64xf32>
    %c0_9 = arith.constant 0 : index
    %c0_10 = arith.constant 0 : index
    %15 = vector.load %arg6[%c0_9, %c0_10] : memref<32x32xf32, #tpu.memory_space<vmem>>, vector<32x32xf32>
    %cst_11 = arith.constant dense<0.000000e+00> : vector<32x64xf32>
    %16 = tpu.matmul %15, %14, %cst_11 {dimension_numbers = #tpu.dot_dimension_numbers<[1], [0], [0], [1], [0, 0, 1, 1], [], []>} : vector<32x32xf32>, vector<32x64xf32>, vector<32x64xf32> -> vector<32x64xf32>
    %c0_12 = arith.constant 0 : index
    %c0_13 = arith.constant 0 : index
    %17 = vector.load %arg7[%c0_12, %c0_13] : memref<32x1xf32, #tpu.memory_space<vmem>>, vector<32x1xf32>
    %18 = vector.broadcast %17 : vector<32x1xf32> to vector<32x64xf32>
    %19 = arith.addf %16, %18 : vector<32x64xf32>
    %20 = math.sin %19 : vector<32x64xf32>
    %c0_14 = arith.constant 0 : index
    %c0_15 = arith.constant 0 : index
    %21 = vector.load %arg8[%c0_14, %c0_15] : memref<32x32xf32, #tpu.memory_space<vmem>>, vector<32x32xf32>
    %cst_16 = arith.constant dense<0.000000e+00> : vector<32x64xf32>
    %22 = tpu.matmul %21, %20, %cst_16 {dimension_numbers = #tpu.dot_dimension_numbers<[1], [0], [0], [1], [0, 0, 1, 1], [], []>} : vector<32x32xf32>, vector<32x64xf32>, vector<32x64xf32> -> vector<32x64xf32>
    %c0_17 = arith.constant 0 : index
    %c0_18 = arith.constant 0 : index
    %23 = vector.load %arg9[%c0_17, %c0_18] : memref<32x1xf32, #tpu.memory_space<vmem>>, vector<32x1xf32>
    %24 = vector.broadcast %23 : vector<32x1xf32> to vector<32x64xf32>
    %25 = arith.addf %22, %24 : vector<32x64xf32>
    %26 = math.sin %25 : vector<32x64xf32>
    %c0_19 = arith.constant 0 : index
    %c0_20 = arith.constant 0 : index
    %27 = vector.load %arg10[%c0_19, %c0_20] : memref<32x32xf32, #tpu.memory_space<vmem>>, vector<32x32xf32>
    %cst_21 = arith.constant dense<0.000000e+00> : vector<32x64xf32>
    %28 = tpu.matmul %27, %26, %cst_21 {dimension_numbers = #tpu.dot_dimension_numbers<[1], [0], [0], [1], [0, 0, 1, 1], [], []>} : vector<32x32xf32>, vector<32x64xf32>, vector<32x64xf32> -> vector<32x64xf32>
    %c0_22 = arith.constant 0 : index
    %c0_23 = arith.constant 0 : index
    %29 = vector.load %arg11[%c0_22, %c0_23] : memref<32x1xf32, #tpu.memory_space<vmem>>, vector<32x1xf32>
    %30 = vector.broadcast %29 : vector<32x1xf32> to vector<32x64xf32>
    %31 = arith.addf %28, %30 : vector<32x64xf32>
    %32 = math.sin %31 : vector<32x64xf32>
    %c0_24 = arith.constant 0 : index
    %c0_25 = arith.constant 0 : index
    %33 = vector.load %arg12[%c0_24, %c0_25] : memref<32x1xf32, #tpu.memory_space<vmem>>, vector<32x1xf32>
    %34 = vector.broadcast %33 : vector<32x1xf32> to vector<32x64xf32>
    %35 = arith.mulf %34, %32 : vector<32x64xf32>
    %cst_26 = arith.constant dense<0.000000e+00> : vector<64xf32>
    %36 = vector.multi_reduction <add>, %35, %cst_26 [0] : vector<32x64xf32> to vector<64xf32>
    %37 = vector.shape_cast %36 : vector<64xf32> to vector<1x64xf32>
    %c0_27 = arith.constant 0 : index
    %c0_28 = arith.constant 0 : index
    %38 = vector.load %arg13[%c0_27, %c0_28] : memref<1x1xf32, #tpu.memory_space<vmem>>, vector<1x1xf32>
    %39 = vector.broadcast %38 : vector<1x1xf32> to vector<1x64xf32>
    %40 = arith.addf %37, %39 : vector<1x64xf32>
    %c0_29 = arith.constant 0 : index
    %c0_30 = arith.constant 0 : index
    %41 = vector.load %arg14[%c0_29, %c0_30] : memref<1x64xf32, #tpu.memory_space<vmem>>, vector<1x64xf32>
    tpu.vector_store %arg14[%c0_29, %c0_30], %40 {strides = array<i32>} : memref<1x64xf32, #tpu.memory_space<vmem>>, vector<1x64xf32>,
    return
  }
  func.func @transform_0(%arg0: i32) -> (i32, i32) {
    %c0_i32 = arith.constant 0 : i32
    %c0_i32_0 = arith.constant 0 : i32
    return %c0_i32, %arg0 : i32, i32
  }
  func.func @transform_1(%arg0: i32) -> (i32, i32) {
    %c0_i32 = arith.constant 0 : i32
    %c0_i32_0 = arith.constant 0 : i32
    %c0_i32_1 = arith.constant 0 : i32
    return %c0_i32, %c0_i32_0 : i32, i32
  }
  func.func @transform_2(%arg0: i32) -> (i32, i32) {
    %c0_i32 = arith.constant 0 : i32
    %c0_i32_0 = arith.constant 0 : i32
    %c0_i32_1 = arith.constant 0 : i32
    return %c0_i32, %c0_i32_0 : i32, i32
  }
  func.func @transform_3(%arg0: i32) -> (i32, i32) {
    %c0_i32 = arith.constant 0 : i32
    %c0_i32_0 = arith.constant 0 : i32
    %c0_i32_1 = arith.constant 0 : i32
    return %c0_i32, %c0_i32_0 : i32, i32
  }
  func.func @transform_4(%arg0: i32) -> (i32, i32) {
    %c0_i32 = arith.constant 0 : i32
    %c0_i32_0 = arith.constant 0 : i32
    %c0_i32_1 = arith.constant 0 : i32
    return %c0_i32, %c0_i32_0 : i32, i32
  }
  func.func @transform_5(%arg0: i32) -> (i32, i32) {
    %c0_i32 = arith.constant 0 : i32
    %c0_i32_0 = arith.constant 0 : i32
    %c0_i32_1 = arith.constant 0 : i32
    return %c0_i32, %c0_i32_0 : i32, i32
  }
  func.func @transform_6(%arg0: i32) -> (i32, i32) {
    %c0_i32 = arith.constant 0 : i32
    %c0_i32_0 = arith.constant 0 : i32
    %c0_i32_1 = arith.constant 0 : i32
    return %c0_i32, %c0_i32_0 : i32, i32
  }
  func.func @transform_7(%arg0: i32) -> (i32, i32) {
    %c0_i32 = arith.constant 0 : i32
    %c0_i32_0 = arith.constant 0 : i32
    %c0_i32_1 = arith.constant 0 : i32
    return %c0_i32, %c0_i32_0 : i32, i32
  }
  func.func @transform_8(%arg0: i32) -> (i32, i32) {
    %c0_i32 = arith.constant 0 : i32
    %c0_i32_0 = arith.constant 0 : i32
    %c0_i32_1 = arith.constant 0 : i32
    return %c0_i32, %c0_i32_0 : i32, i32
  }
  func.func @transform_9(%arg0: i32) -> (i32, i32) {
    %c0_i32 = arith.constant 0 : i32
    %c0_i32_0 = arith.constant 0 : i32
    %c0_i32_1 = arith.constant 0 : i32
    return %c0_i32, %c0_i32_0 : i32, i32
  }
  func.func @transform_10(%arg0: i32) -> (i32, i32) {
    %c0_i32 = arith.constant 0 : i32
    %c0_i32_0 = arith.constant 0 : i32
    %c0_i32_1 = arith.constant 0 : i32
    return %c0_i32, %c0_i32_0 : i32, i32
  }
  func.func @transform_11(%arg0: i32) -> (i32, i32) {
    %c0_i32 = arith.constant 0 : i32
    %c0_i32_0 = arith.constant 0 : i32
    %c0_i32_1 = arith.constant 0 : i32
    return %c0_i32, %c0_i32_0 : i32, i32
  }
  func.func @transform_12(%arg0: i32) -> (i32, i32) {
    %c0_i32 = arith.constant 0 : i32
    %c0_i32_0 = arith.constant 0 : i32
    %c0_i32_1 = arith.constant 0 : i32
    return %c0_i32, %c0_i32_0 : i32, i32
  }
  func.func @transform_13(%arg0: i32) -> (i32, i32) {
    %c0_i32 = arith.constant 0 : i32
    %c0_i32_0 = arith.constant 0 : i32
    return %c0_i32, %arg0 : i32, i32
  }
}

</mosaic_0001>

<llo_original>
// kernel: tpu_custom_call.1
$region0: #{tpu_custom_call.1}
  #allocation0 [shape = 'u32[]', space=smem, size = 0x4, offset = 0x4, fixed_abs, tag = 'smem constant byte address 0x4 - core index']
  #allocation1 [shape = 'u32[144,128]{1,0:T(1,128)}', space=vmem, size = 0x12000, scoped, tag = 'internal scratch']
  #allocation2 [shape = 'f32[1,1]{1,0:T(1,128)S(1)}', space=vmem, size = 0x200, scoped, tag = 'scoped memory for tpu_custom_call.1']
  %s0 = inlined_call_operand.vmem [shape: f32[1,64], index: 0, kind: input, shape index: {}]
  %s1 = inlined_call_operand.vmem [shape: f32[32,1], index: 1, kind: input, shape index: {}]
  %s2 = inlined_call_operand.vmem [shape: f32[32,1], index: 2, kind: input, shape index: {}]
  %s3 = inlined_call_operand.vmem [shape: f32[32,32], index: 3, kind: input, shape index: {}]
  %s4 = inlined_call_operand.vmem [shape: f32[32,1], index: 4, kind: input, shape index: {}]
  %s5 = inlined_call_operand.vmem [shape: f32[32,32], index: 5, kind: input, shape index: {}]
  %s6 = inlined_call_operand.vmem [shape: f32[32,1], index: 6, kind: input, shape index: {}]
  %s7 = inlined_call_operand.vmem [shape: f32[32,32], index: 7, kind: input, shape index: {}]
  %s8 = inlined_call_operand.vmem [shape: f32[32,1], index: 8, kind: input, shape index: {}]
  %s9 = inlined_call_operand.vmem [shape: f32[32,32], index: 9, kind: input, shape index: {}]
  %s10 = inlined_call_operand.vmem [shape: f32[32,1], index: 10, kind: input, shape index: {}]
  %s11 = inlined_call_operand.vmem [shape: f32[32,1], index: 11, kind: input, shape index: {}]
  %s12 = inlined_call_operand.<no memory space> [shape: f32[1,1], index: 12, kind: input, shape index: {}]
  %s13 = inlined_call_operand.hbm [shape: f32[1,64], index: 13, kind: output, shape index: {}]
  %s14 = sld [smem:[#allocation0]]
  $region62: #{tpu_custom_call.1} parent=0
    _
  %s16 = ssub.s32 1, %s14
  %s17 = scalar_select 0, %s16, %s14
  %v18 = vstv %s12
  %19 = vst [vmem:[#allocation2] sm:$0x1] %v18
  $region1: #{tpu_custom_call.1} parent=0
    #allocation3 [shape = 'u8[512]{0}', space=vmem, size = 0x400, scoped, tag = 'output window, operand 0, single buffered']
    #allocation4 [shape = 's32[1]{0}', space=sflag, size = 0x4, scoped, tag = 'scoped memory for tpu_custom_call.1']
    %20 = vsyncpa [#allocation4], 0
    // Predicated region
    $region2: #{tpu_custom_call.1} parent=1 // pred_check
      _
    $region3: #{tpu_custom_call.1} parent=1 // pred_check_branch
      %22 = sbr.rel (0) target = $region5
    $region4: #{tpu_custom_call.1} parent=1 // pred_region
      _
    $region5: #{tpu_custom_call.1} parent=1 // pred_fallthru
      _
    // Predicated region
    $region6: #{tpu_custom_call.1} parent=1 // pred_check
      _
    $region7: #{tpu_custom_call.1} parent=1 // pred_check_branch
      %24 = sbr.rel (0) target = $region9
    $region8: #{tpu_custom_call.1} parent=1 // pred_region
      _
    $region9: #{tpu_custom_call.1} parent=1 // pred_fallthru
      _
    // Predicated region
    $region10: #{tpu_custom_call.1} parent=1 // pred_check
      _
    $region11: #{tpu_custom_call.1} parent=1 // pred_check_branch
      %26 = sbr.rel (0) target = $region13
    $region12: #{tpu_custom_call.1} parent=1 // pred_region
      _
    $region13: #{tpu_custom_call.1} parent=1 // pred_fallthru
      _
    // Predicated region
    $region14: #{tpu_custom_call.1} parent=1 // pred_check
      _
    $region15: #{tpu_custom_call.1} parent=1 // pred_check_branch
      %28 = sbr.rel (0) target = $region17
    $region16: #{tpu_custom_call.1} parent=1 // pred_region
      _
    $region17: #{tpu_custom_call.1} parent=1 // pred_fallthru
      _
    // Predicated region
    $region18: #{tpu_custom_call.1} parent=1 // pred_check
      _
    $region19: #{tpu_custom_call.1} parent=1 // pred_check_branch
      %30 = sbr.rel (0) target = $region21
    $region20: #{tpu_custom_call.1} parent=1 // pred_region
      _
    $region21: #{tpu_custom_call.1} parent=1 // pred_fallthru
      _
    // Predicated region
    $region22: #{tpu_custom_call.1} parent=1 // pred_check
      _
    $region23: #{tpu_custom_call.1} parent=1 // pred_check_branch
      %32 = sbr.rel (0) target = $region25
    $region24: #{tpu_custom_call.1} parent=1 // pred_region
      _
    $region25: #{tpu_custom_call.1} parent=1 // pred_fallthru
      _
    // Predicated region
    $region26: #{tpu_custom_call.1} parent=1 // pred_check
      _
    $region27: #{tpu_custom_call.1} parent=1 // pred_check_branch
      %34 = sbr.rel (0) target = $region29
    $region28: #{tpu_custom_call.1} parent=1 // pred_region
      _
    $region29: #{tpu_custom_call.1} parent=1 // pred_fallthru
      _
    // Predicated region
    $region30: #{tpu_custom_call.1} parent=1 // pred_check
      _
    $region31: #{tpu_custom_call.1} parent=1 // pred_check_branch
      %36 = sbr.rel (0) target = $region33
    $region32: #{tpu_custom_call.1} parent=1 // pred_region
      _
    $region33: #{tpu_custom_call.1} parent=1 // pred_fallthru
      _
    // Predicated region
    $region34: #{tpu_custom_call.1} parent=1 // pred_check
      _
    $region35: #{tpu_custom_call.1} parent=1 // pred_check_branch
      %38 = sbr.rel (0) target = $region37
    $region36: #{tpu_custom_call.1} parent=1 // pred_region
      _
    $region37: #{tpu_custom_call.1} parent=1 // pred_fallthru
      _
    // Predicated region
    $region38: #{tpu_custom_call.1} parent=1 // pred_check
      _
    $region39: #{tpu_custom_call.1} parent=1 // pred_check_branch
      %40 = sbr.rel (0) target = $region41
    $region40: #{tpu_custom_call.1} parent=1 // pred_region
      _
    $region41: #{tpu_custom_call.1} parent=1 // pred_fallthru
      _
    // Predicated region
    $region42: #{tpu_custom_call.1} parent=1 // pred_check
      _
    $region43: #{tpu_custom_call.1} parent=1 // pred_check_branch
      %42 = sbr.rel (0) target = $region45
    $region44: #{tpu_custom_call.1} parent=1 // pred_region
      _
    $region45: #{tpu_custom_call.1} parent=1 // pred_fallthru
      _
    // Predicated region
    $region46: #{tpu_custom_call.1} parent=1 // pred_check
      _
    $region47: #{tpu_custom_call.1} parent=1 // pred_check_branch
      %44 = sbr.rel (0) target = $region49
    $region48: #{tpu_custom_call.1} parent=1 // pred_region
      _
    $region49: #{tpu_custom_call.1} parent=1 // pred_fallthru
      _
    // Predicated region
    $region50: #{tpu_custom_call.1} parent=1 // pred_check
      _
    $region51: #{tpu_custom_call.1} parent=1 // pred_check_branch
      %46 = sbr.rel (0) target = $region53
    $region52: #{tpu_custom_call.1} parent=1 // pred_region
      _
    $region53: #{tpu_custom_call.1} parent=1 // pred_fallthru
      _
    %v47 = vld [vmem:[%s0] sm:$0x1]
    %v48 = vld [vmem:[%s1] sm:$0xff]
    %v49 = vld [vmem:[%s1 + $0x8] sm:$0xff]
    %v50 = vld [vmem:[%s1 + $0x10] sm:$0xff]
    %v51 = vld [vmem:[%s1 + $0x18] sm:$0xff]
    %53 = vset.pattern.permute.xlu0 0
    %54 = vperm.xlu0 %53, %v48
    %v55 = vpop.permute.xlu0 %54
    %58 = vset.pattern.permute.xlu0 0
    %59 = vperm.xlu0 %58, %v49
    %v60 = vpop.permute.xlu0 %59
    %63 = vset.pattern.permute.xlu0 0
    %64 = vperm.xlu0 %63, %v50
    %v65 = vpop.permute.xlu0 %64
    %68 = vset.pattern.permute.xlu0 0
    %69 = vperm.xlu0 %68, %v51
    %v70 = vpop.permute.xlu0 %69
    %v73 = vlaneseq
    %v74 = vshrl.u32 %v73, 7
    %v75 = vsub.s32 0, %v74
    %v76 = vrot.slane %v47, %v75
    %v78 = vmul.f32 %v55, %v76
    %v79 = vmul.f32 %v60, %v76
    %v80 = vmul.f32 %v65, %v76
    %v81 = vmul.f32 %v70, %v76
    %v82 = vld [vmem:[%s2] sm:$0xff]
    %v83 = vld [vmem:[%s2 + $0x8] sm:$0xff]
    %v84 = vld [vmem:[%s2 + $0x10] sm:$0xff]
    %v85 = vld [vmem:[%s2 + $0x18] sm:$0xff]
    %87 = vset.pattern.permute.xlu0 0
    %88 = vperm.xlu0 %87, %v82
    %v89 = vpop.permute.xlu0 %88
    %92 = vset.pattern.permute.xlu0 0
    %93 = vperm.xlu0 %92, %v83
    %v94 = vpop.permute.xlu0 %93
    %97 = vset.pattern.permute.xlu0 0
    %98 = vperm.xlu0 %97, %v84
    %v99 = vpop.permute.xlu0 %98
    %102 = vset.pattern.permute.xlu0 0
    %103 = vperm.xlu0 %102, %v85
    %v104 = vpop.permute.xlu0 %103
    %v106 = vadd.f32 %v78, %v89
    %v107 = vadd.f32 %v79, %v94
    %v108 = vadd.f32 %v80, %v99
    %v109 = vadd.f32 %v81, %v104
    %v110 = vand.u32 2147483647, %v106
    %vm111 = vcmp.le.f32.partialorder %v110, 0.7853982
    %vm112 = vcmp.lt.s32.totalorder %v106, 0
    %v113 = vand.u32 %v106, 2139095040
    %v114 = vshrl.u32 %v113, 23
    %v115 = vsub.s32 %v114, 127
    %v116 = vand.u32 2147483647, %v106
    %v117 = vand.u32 %v116, 8388607
    %v118 = vor.u32 %v117, 8388608
    %v119 = vsub.s32 0, %v118
    %v120 = vadd.s32 %v115, 1
    %vm121 = vcmp.gt.s32.totalorder %v120, 0
    %v122 = vsel %vm121, %v120, 0
    %v123 = vshrl.u32 %v122, 5
    %v124 = vand.u32 %v122, 31
    %v125 = vsub.s32 32, %v124
    %v126 = vshrl.u32 683565275, %v125
    %v127 = vshll.u32 683565275, %v124
    %v128 = vshrl.u32 2475754826, %v125
    %v129 = vor.u32 %v127, %v128
    %v130 = vshll.u32 2475754826, %v124
    %v131 = vshrl.u32 2131351028, %v125
    %v132 = vor.u32 %v130, %v131
    %v133 = vshll.u32 2131351028, %v124
    %v134 = vshrl.u32 2102212464, %v125
    %v135 = vor.u32 %v133, %v134
    %v136 = vshll.u32 2102212464, %v124
    %v137 = vshrl.u32 920167782, %v125
    %v138 = vor.u32 %v136, %v137
    %v139 = vshll.u32 920167782, %v124
    %v140 = vshrl.u32 1326507024, %v125
    %v141 = vor.u32 %v139, %v140
    %vm142 = vcmp.lt.s32.totalorder %v123, 1
    %vm143 = vcmp.lt.s32.totalorder %v123, 2
    %vm144 = vcmp.lt.s32.totalorder %v123, 3
    %vm145 = vcmp.lt.s32.totalorder %v123, 4
    %v146 = vsel %vm142, %v126, %v129
    %v147 = vsel %vm145, %v135, 2102212464
    %v148 = vsel %vm144, %v132, %v147
    %v149 = vsel %vm143, %v146, %v148
    %v150 = vsel %vm142, %v129, %v132
    %v151 = vsel %vm145, %v138, 920167782
    %v152 = vsel %vm144, %v135, %v151
    %v153 = vsel %vm143, %v150, %v152
    %v154 = vsel %vm142, %v132, %v135
    %v155 = vsel %vm145, %v141, 1326507024
    %v156 = vsel %vm144, %v138, %v155
    %v157 = vsel %vm143, %v154, %v156
    %v158 = vshll.u32 %v118, 8
    %v159 = vmul.u32.u64.compose %v158, %v157
    %v160 = vextract.low.u32 %v159
    %v161 = vextract.high.u32 %v159
    %v162 = vmul.u32.u64.compose %v158, %v153
    %v163 = vextract.low.u32 %v162
    %v164 = vextract.high.u32 %v162
    %v165 = vmul.u32 %v158, %v149
    %v166 = vadd.s32 %v161, %v163
    %vm167 = vc.u32 %v161, %v163
    %v168 = vadd.s32 %v164, 1
    %v169 = vsel %vm167, %v168, %v164
    %v170 = vadd.s32 %v165, %v169
    %v171 = vadd.s32 %v170, 536870912
    %v172 = vshrl.u32 %v171, 30
    %v173 = vshll.u32 %v172, 30
    %v174 = vsub.s32 %v170, %v173
    %vm175 = vcmp.lt.s32.totalorder %v174, 0
    %v176 = vsub.s32 0, %v174
    %v177 = vsel %vm175, %v176, %v174
    %v178 = vclz %v177
    %v179 = vsub.s32 %v178, 2
    %vm180 = vcmp.gt.s32.totalorder 0, %v179
    %v181 = vsel %vm180, 0, %v179
    %v182 = vsub.s32 32, %v181
    %v183 = vshll.u32 %v174, %v181
    %v184 = vshrl.u32 %v166, %v182
    %v185 = vor.u32 %v183, %v184
    %v186 = vsub.s32 4294967266, %v181
    %v187 = vadd.s32 %v186, 127
    %v188 = vshll.u32 %v187, 23
    %v189 = vor.u32 4788187, %v188
    %v190 = vand.u32 2147483647, %v189
    %v192 = vcvt.s32.f32 %v185
    %v193 = vmul.f32 %v192, %v190
    %v194 = vxor.u32 %v193, 2147483648
    %v195 = vsel %vm112, %v194, %v193
    %v196 = vsub.s32 4, %v172
    %v197 = vsel %vm112, %v196, %v172
    %v198 = vsel %vm111, %v106, %v195
    %v199 = vsel %vm111, 0, %v197
    %v200 = vcosq.f32.pop %v198
    %v201 = vsinq.f32.pop %v198
    %vm202 = vweird.f32 %v106
    %v203 = vadd.s32 %v199, 3
    %v204 = vand.u32 %v203, 3
    %vm205 = vcmp.lt.s32.totalorder %v204, 2
    %vm206 = vcmp.eq.s32.totalorder %v204, 0
    %v207 = vxor.u32 %v201, 2147483648
    %v208 = vsel %vm206, %v200, %v207
    %vm209 = vcmp.eq.s32.totalorder %v204, 2
    %v210 = vxor.u32 %v200, 2147483648
    %v211 = vsel %vm209, %v210, %v201
    %v212 = vsel %vm205, %v208, %v211
    %v213 = vsel %vm202, nan, %v212
    %v214 = vand.u32 2147483647, %v107
    %vm215 = vcmp.le.f32.partialorder %v214, 0.7853982
    %vm216 = vcmp.lt.s32.totalorder %v107, 0
    %v217 = vand.u32 %v107, 2139095040
    %v218 = vshrl.u32 %v217, 23
    %v219 = vsub.s32 %v218, 127
    %v220 = vand.u32 2147483647, %v107
    %v221 = vand.u32 %v220, 8388607
    %v222 = vor.u32 %v221, 8388608
    %v223 = vsub.s32 0, %v222
    %v224 = vadd.s32 %v219, 1
    %vm225 = vcmp.gt.s32.totalorder %v224, 0
    %v226 = vsel %vm225, %v224, 0
    %v227 = vshrl.u32 %v226, 5
    %v228 = vand.u32 %v226, 31
    %v229 = vsub.s32 32, %v228
    %v230 = vshrl.u32 683565275, %v229
    %v231 = vshll.u32 683565275, %v228
    %v232 = vshrl.u32 2475754826, %v229
    %v233 = vor.u32 %v231, %v232
    %v234 = vshll.u32 2475754826, %v228
    %v235 = vshrl.u32 2131351028, %v229
    %v236 = vor.u32 %v234, %v235
    %v237 = vshll.u32 2131351028, %v228
    %v238 = vshrl.u32 2102212464, %v229
    %v239 = vor.u32 %v237, %v238
    %v240 = vshll.u32 2102212464, %v228
    %v241 = vshrl.u32 920167782, %v229
    %v242 = vor.u32 %v240, %v241
    %v243 = vshll.u32 920167782, %v228
    %v244 = vshrl.u32 1326507024, %v229
    %v245 = vor.u32 %v243, %v244
    %vm246 = vcmp.lt.s32.totalorder %v227, 1
    %vm247 = vcmp.lt.s32.totalorder %v227, 2
    %vm248 = vcmp.lt.s32.totalorder %v227, 3
    %vm249 = vcmp.lt.s32.totalorder %v227, 4
    %v250 = vsel %vm246, %v230, %v233
    %v251 = vsel %vm249, %v239, 2102212464
    %v252 = vsel %vm248, %v236, %v251
    %v253 = vsel %vm247, %v250, %v252
    %v254 = vsel %vm246, %v233, %v236
    %v255 = vsel %vm249, %v242, 920167782
    %v256 = vsel %vm248, %v239, %v255
    %v257 = vsel %vm247, %v254, %v256
    %v258 = vsel %vm246, %v236, %v239
    %v259 = vsel %vm249, %v245, 1326507024
    %v260 = vsel %vm248, %v242, %v259
    %v261 = vsel %vm247, %v258, %v260
    %v262 = vshll.u32 %v222, 8
    %v263 = vmul.u32.u64.compose %v262, %v261
    %v264 = vextract.low.u32 %v263
    %v265 = vextract.high.u32 %v263
    %v266 = vmul.u32.u64.compose %v262, %v257
    %v267 = vextract.low.u32 %v266
    %v268 = vextract.high.u32 %v266
    %v269 = vmul.u32 %v262, %v253
    %v270 = vadd.s32 %v265, %v267
    %vm271 = vc.u32 %v265, %v267
    %v272 = vadd.s32 %v268, 1
    %v273 = vsel %vm271, %v272, %v268
    %v274 = vadd.s32 %v269, %v273
    %v275 = vadd.s32 %v274, 536870912
    %v276 = vshrl.u32 %v275, 30
    %v277 = vshll.u32 %v276, 30
    %v278 = vsub.s32 %v274, %v277
    %vm279 = vcmp.lt.s32.totalorder %v278, 0
    %v280 = vsub.s32 0, %v278
    %v281 = vsel %vm279, %v280, %v278
    %v282 = vclz %v281
    %v283 = vsub.s32 %v282, 2
    %vm284 = vcmp.gt.s32.totalorder 0, %v283
    %v285 = vsel %vm284, 0, %v283
    %v286 = vsub.s32 32, %v285
    %v287 = vshll.u32 %v278, %v285
    %v288 = vshrl.u32 %v270, %v286
    %v289 = vor.u32 %v287, %v288
    %v290 = vsub.s32 4294967266, %v285
    %v291 = vadd.s32 %v290, 127
    %v292 = vshll.u32 %v291, 23
    %v293 = vor.u32 4788187, %v292
    %v294 = vand.u32 2147483647, %v293
    %v296 = vcvt.s32.f32 %v289
    %v297 = vmul.f32 %v296, %v294
    %v298 = vxor.u32 %v297, 2147483648
    %v299 = vsel %vm216, %v298, %v297
    %v300 = vsub.s32 4, %v276
    %v301 = vsel %vm216, %v300, %v276
    %v302 = vsel %vm215, %v107, %v299
    %v303 = vsel %vm215, 0, %v301
    %v304 = vcosq.f32.pop %v302
    %v305 = vsinq.f32.pop %v302
    %vm306 = vweird.f32 %v107
    %v307 = vadd.s32 %v303, 3
    %v308 = vand.u32 %v307, 3
    %vm309 = vcmp.lt.s32.totalorder %v308, 2
    %vm310 = vcmp.eq.s32.totalorder %v308, 0
    %v311 = vxor.u32 %v305, 2147483648
    %v312 = vsel %vm310, %v304, %v311
    %vm313 = vcmp.eq.s32.totalorder %v308, 2
    %v314 = vxor.u32 %v304, 2147483648
    %v315 = vsel %vm313, %v314, %v305
    %v316 = vsel %vm309, %v312, %v315
    %v317 = vsel %vm306, nan, %v316
    %v318 = vand.u32 2147483647, %v108
    %vm319 = vcmp.le.f32.partialorder %v318, 0.7853982
    %vm320 = vcmp.lt.s32.totalorder %v108, 0
    %v321 = vand.u32 %v108, 2139095040
    %v322 = vshrl.u32 %v321, 23
    %v323 = vsub.s32 %v322, 127
    %v324 = vand.u32 2147483647, %v108
    %v325 = vand.u32 %v324, 8388607
    %v326 = vor.u32 %v325, 8388608
    %v327 = vsub.s32 0, %v326
    %v328 = vadd.s32 %v323, 1
    %vm329 = vcmp.gt.s32.totalorder %v328, 0
    %v330 = vsel %vm329, %v328, 0
    %v331 = vshrl.u32 %v330, 5
    %v332 = vand.u32 %v330, 31
    %v333 = vsub.s32 32, %v332
    %v334 = vshrl.u32 683565275, %v333
    %v335 = vshll.u32 683565275, %v332
    %v336 = vshrl.u32 2475754826, %v333
    %v337 = vor.u32 %v335, %v336
    %v338 = vshll.u32 2475754826, %v332
    %v339 = vshrl.u32 2131351028, %v333
    %v340 = vor.u32 %v338, %v339
    %v341 = vshll.u32 2131351028, %v332
    %v342 = vshrl.u32 2102212464, %v333
    %v343 = vor.u32 %v341, %v342
    %v344 = vshll.u32 2102212464, %v332
    %v345 = vshrl.u32 920167782, %v333
    %v346 = vor.u32 %v344, %v345
    %v347 = vshll.u32 920167782, %v332
    %v348 = vshrl.u32 1326507024, %v333
    %v349 = vor.u32 %v347, %v348
    %vm350 = vcmp.lt.s32.totalorder %v331, 1
    %vm351 = vcmp.lt.s32.totalorder %v331, 2
    %vm352 = vcmp.lt.s32.totalorder %v331, 3
    %vm353 = vcmp.lt.s32.totalorder %v331, 4
    %v354 = vsel %vm350, %v334, %v337
    %v355 = vsel %vm353, %v343, 2102212464
    %v356 = vsel %vm352, %v340, %v355
    %v357 = vsel %vm351, %v354, %v356
    %v358 = vsel %vm350, %v337, %v340
    %v359 = vsel %vm353, %v346, 920167782
    %v360 = vsel %vm352, %v343, %v359
    %v361 = vsel %vm351, %v358, %v360
    %v362 = vsel %vm350, %v340, %v343
    %v363 = vsel %vm353, %v349, 1326507024
    %v364 = vsel %vm352, %v346, %v363
    %v365 = vsel %vm351, %v362, %v364
    %v366 = vshll.u32 %v326, 8
    %v367 = vmul.u32.u64.compose %v366, %v365
    %v368 = vextract.low.u32 %v367
    %v369 = vextract.high.u32 %v367
    %v370 = vmul.u32.u64.compose %v366, %v361
    %v371 = vextract.low.u32 %v370
    %v372 = vextract.high.u32 %v370
    %v373 = vmul.u32 %v366, %v357
    %v374 = vadd.s32 %v369, %v371
    %vm375 = vc.u32 %v369, %v371
    %v376 = vadd.s32 %v372, 1
    %v377 = vsel %vm375, %v376, %v372
    %v378 = vadd.s32 %v373, %v377
    %v379 = vadd.s32 %v378, 536870912
    %v380 = vshrl.u32 %v379, 30
    %v381 = vshll.u32 %v380, 30
    %v382 = vsub.s32 %v378, %v381
    %vm383 = vcmp.lt.s32.totalorder %v382, 0
    %v384 = vsub.s32 0, %v382
    %v385 = vsel %vm383, %v384, %v382
    %v386 = vclz %v385
    %v387 = vsub.s32 %v386, 2
    %vm388 = vcmp.gt.s32.totalorder 0, %v387
    %v389 = vsel %vm388, 0, %v387
    %v390 = vsub.s32 32, %v389
    %v391 = vshll.u32 %v382, %v389
    %v392 = vshrl.u32 %v374, %v390
    %v393 = vor.u32 %v391, %v392
    %v394 = vsub.s32 4294967266, %v389
    %v395 = vadd.s32 %v394, 127
    %v396 = vshll.u32 %v395, 23
    %v397 = vor.u32 4788187, %v396
    %v398 = vand.u32 2147483647, %v397
    %v400 = vcvt.s32.f32 %v393
    %v401 = vmul.f32 %v400, %v398
    %v402 = vxor.u32 %v401, 2147483648
    %v403 = vsel %vm320, %v402, %v401
    %v404 = vsub.s32 4, %v380
    %v405 = vsel %vm320, %v404, %v380
    %v406 = vsel %vm319, %v108, %v403
    %v407 = vsel %vm319, 0, %v405
    %v408 = vcosq.f32.pop %v406
    %v409 = vsinq.f32.pop %v406
    %vm410 = vweird.f32 %v108
    %v411 = vadd.s32 %v407, 3
    %v412 = vand.u32 %v411, 3
    %vm413 = vcmp.lt.s32.totalorder %v412, 2
    %vm414 = vcmp.eq.s32.totalorder %v412, 0
    %v415 = vxor.u32 %v409, 2147483648
    %v416 = vsel %vm414, %v408, %v415
    %vm417 = vcmp.eq.s32.totalorder %v412, 2
    %v418 = vxor.u32 %v408, 2147483648
    %v419 = vsel %vm417, %v418, %v409
    %v420 = vsel %vm413, %v416, %v419
    %v421 = vsel %vm410, nan, %v420
    %v422 = vand.u32 2147483647, %v109
    %vm423 = vcmp.le.f32.partialorder %v422, 0.7853982
    %vm424 = vcmp.lt.s32.totalorder %v109, 0
    %v425 = vand.u32 %v109, 2139095040
    %v426 = vshrl.u32 %v425, 23
    %v427 = vsub.s32 %v426, 127
    %v428 = vand.u32 2147483647, %v109
    %v429 = vand.u32 %v428, 8388607
    %v430 = vor.u32 %v429, 8388608
    %v431 = vsub.s32 0, %v430
    %v432 = vadd.s32 %v427, 1
    %vm433 = vcmp.gt.s32.totalorder %v432, 0
    %v434 = vsel %vm433, %v432, 0
    %v435 = vshrl.u32 %v434, 5
    %v436 = vand.u32 %v434, 31
    %v437 = vsub.s32 32, %v436
    %v438 = vshrl.u32 683565275, %v437
    %v439 = vshll.u32 683565275, %v436
    %v440 = vshrl.u32 2475754826, %v437
    %v441 = vor.u32 %v439, %v440
    %v442 = vshll.u32 2475754826, %v436
    %v443 = vshrl.u32 2131351028, %v437
    %v444 = vor.u32 %v442, %v443
    %v445 = vshll.u32 2131351028, %v436
    %v446 = vshrl.u32 2102212464, %v437
    %v447 = vor.u32 %v445, %v446
    %v448 = vshll.u32 2102212464, %v436
    %v449 = vshrl.u32 920167782, %v437
    %v450 = vor.u32 %v448, %v449
    %v451 = vshll.u32 920167782, %v436
    %v452 = vshrl.u32 1326507024, %v437
    %v453 = vor.u32 %v451, %v452
    %vm454 = vcmp.lt.s32.totalorder %v435, 1
    %vm455 = vcmp.lt.s32.totalorder %v435, 2
    %vm456 = vcmp.lt.s32.totalorder %v435, 3
    %vm457 = vcmp.lt.s32.totalorder %v435, 4
    %v458 = vsel %vm454, %v438, %v441
    %v459 = vsel %vm457, %v447, 2102212464
    %v460 = vsel %vm456, %v444, %v459
    %v461 = vsel %vm455, %v458, %v460
    %v462 = vsel %vm454, %v441, %v444
    %v463 = vsel %vm457, %v450, 920167782
    %v464 = vsel %vm456, %v447, %v463
    %v465 = vsel %vm455, %v462, %v464
    %v466 = vsel %vm454, %v444, %v447
    %v467 = vsel %vm457, %v453, 1326507024
    %v468 = vsel %vm456, %v450, %v467
    %v469 = vsel %vm455, %v466, %v468
    %v470 = vshll.u32 %v430, 8
    %v471 = vmul.u32.u64.compose %v470, %v469
    %v472 = vextract.low.u32 %v471
    %v473 = vextract.high.u32 %v471
    %v474 = vmul.u32.u64.compose %v470, %v465
    %v475 = vextract.low.u32 %v474
    %v476 = vextract.high.u32 %v474
    %v477 = vmul.u32 %v470, %v461
    %v478 = vadd.s32 %v473, %v475
    %vm479 = vc.u32 %v473, %v475
    %v480 = vadd.s32 %v476, 1
    %v481 = vsel %vm479, %v480, %v476
    %v482 = vadd.s32 %v477, %v481
    %v483 = vadd.s32 %v482, 536870912
    %v484 = vshrl.u32 %v483, 30
    %v485 = vshll.u32 %v484, 30
    %v486 = vsub.s32 %v482, %v485
    %vm487 = vcmp.lt.s32.totalorder %v486, 0
    %v488 = vsub.s32 0, %v486
    %v489 = vsel %vm487, %v488, %v486
    %v490 = vclz %v489
    %v491 = vsub.s32 %v490, 2
    %vm492 = vcmp.gt.s32.totalorder 0, %v491
    %v493 = vsel %vm492, 0, %v491
    %v494 = vsub.s32 32, %v493
    %v495 = vshll.u32 %v486, %v493
    %v496 = vshrl.u32 %v478, %v494
    %v497 = vor.u32 %v495, %v496
    %v498 = vsub.s32 4294967266, %v493
    %v499 = vadd.s32 %v498, 127
    %v500 = vshll.u32 %v499, 23
    %v501 = vor.u32 4788187, %v500
    %v502 = vand.u32 2147483647, %v501
    %v504 = vcvt.s32.f32 %v497
    %v505 = vmul.f32 %v504, %v502
    %v506 = vxor.u32 %v505, 2147483648
    %v507 = vsel %vm424, %v506, %v505
    %v508 = vsub.s32 4, %v484
    %v509 = vsel %vm424, %v508, %v484
    %v510 = vsel %vm423, %v109, %v507
    %v511 = vsel %vm423, 0, %v509
    %v512 = vcosq.f32.pop %v510
    %v513 = vsinq.f32.pop %v510
    %vm514 = vweird.f32 %v109
    %v515 = vadd.s32 %v511, 3
    %v516 = vand.u32 %v515, 3
    %vm517 = vcmp.lt.s32.totalorder %v516, 2
    %vm518 = vcmp.eq.s32.totalorder %v516, 0
    %v519 = vxor.u32 %v513, 2147483648
    %v520 = vsel %vm518, %v512, %v519
    %vm521 = vcmp.eq.s32.totalorder %v516, 2
    %v522 = vxor.u32 %v512, 2147483648
    %v523 = vsel %vm521, %v522, %v513
    %v524 = vsel %vm517, %v520, %v523
    %v525 = vsel %vm514, nan, %v524
    %v526 = vld [vmem:[%s3] sm:$0xff]
    %v527 = vld [vmem:[%s3 + $0x8] sm:$0xff]
    %v528 = vld [vmem:[%s3 + $0x10] sm:$0xff]
    %v529 = vld [vmem:[%s3 + $0x18] sm:$0xff]
    %v530 = vld [vmem:[%s4] sm:$0xff]
    %v531 = vld [vmem:[%s4 + $0x8] sm:$0xff]
    %v532 = vld [vmem:[%s4 + $0x10] sm:$0xff]
    %v533 = vld [vmem:[%s4 + $0x18] sm:$0xff]
    %535 = vset.pattern.permute.xlu0 0
    %536 = vperm.xlu0 %535, %v530
    %v537 = vpop.permute.xlu0 %536
    %540 = vset.pattern.permute.xlu0 0
    %541 = vperm.xlu0 %540, %v531
    %v542 = vpop.permute.xlu0 %541
    %545 = vset.pattern.permute.xlu0 0
    %546 = vperm.xlu0 %545, %v532
    %v547 = vpop.permute.xlu0 %546
    %550 = vset.pattern.permute.xlu0 0
    %551 = vperm.xlu0 %550, %v533
    %v552 = vpop.permute.xlu0 %551
    %vm554 = vcmask 261120
    %v556 = vsel %vm554, %v526, 0
    %v559 = vsel %vm554, %v527, 0
    %v562 = vsel %vm554, %v528, 0
    %v565 = vsel %vm554, %v529, 0
    %567 = vmatprep.subr.mxu0 0.0
    %568 = vmatpush1.msra.mxu0 %v213
    %569 = vmatprep.subr.mxu0 0.0
    %570 = vmatpush1.msra.mxu0 %v317
    %571 = vmatprep.subr.mxu0 0.0
    %572 = vmatpush1.msra.mxu0 %v421
    %573 = vmatprep.subr.mxu0 0.0
    %574 = vmatpush1.msra.mxu0 %v525
    %575 = vmatprep.subr.mxu0 0.0
    %576 = vmatpush1.msra.mxu0 0.0
    %577 = vmatprep.subr.mxu0 0.0
    %578 = vmatpush1.msra.mxu0 0.0
    %579 = vmatprep.subr.mxu0 0.0
    %580 = vmatpush1.msra.mxu0 0.0
    %581 = vmatprep.subr.mxu0 0.0
    %582 = vmatpush1.msra.mxu0 0.0
    %583 = vmatprep.subr.mxu0 0.0
    %584 = vmatpush1.msra.mxu0 0.0
    %585 = vmatprep.subr.mxu0 0.0
    %586 = vmatpush1.msra.mxu0 0.0
    %587 = vmatprep.subr.mxu0 0.0
    %588 = vmatpush1.msra.mxu0 0.0
    %589 = vmatprep.subr.mxu0 0.0
    %590 = vmatpush1.msra.mxu0 0.0
    %591 = vmatprep.subr.mxu0 0.0
    %592 = vmatpush1.msra.mxu0 0.0
    %593 = vmatprep.subr.mxu0 0.0
    %594 = vmatpush1.msra.mxu0 0.0
    %595 = vmatprep.subr.mxu0 0.0
    %596 = vmatpush1.msra.mxu0 0.0
    %597 = vmatprep.subr.mxu0 0.0
    %598 = vmatpush1.msra.mxu0 0.0
    %599 = vmatprep.subr.mxu0 0.0
    %600 = vmatpush1.msra.mxu0 0.0
    %601 = vmatprep.subr.mxu0 0.0
    %602 = vmatpush1.msra.mxu0 0.0
    %603 = vmatprep.subr.mxu0 0.0
    %604 = vmatpush1.msra.mxu0 0.0
    %605 = vmatprep.subr.mxu0 0.0
    %606 = vmatpush1.msra.mxu0 0.0
    %607 = vmatprep.subr.mxu0 0.0
    %608 = vmatpush1.msra.mxu0 0.0
    %609 = vmatprep.subr.mxu0 0.0
    %610 = vmatpush1.msra.mxu0 0.0
    %611 = vmatprep.subr.mxu0 0.0
    %612 = vmatpush1.msra.mxu0 0.0
    %613 = vmatprep.subr.mxu0 0.0
    %614 = vmatpush1.msra.mxu0 0.0
    %615 = vmatprep.subr.mxu0 0.0
    %616 = vmatpush1.msra.mxu0 0.0
    %617 = vmatprep.subr.mxu0 0.0
    %618 = vmatpush1.msra.mxu0 0.0
    %619 = vmatprep.subr.mxu0 0.0
    %620 = vmatpush1.msra.mxu0 0.0
    %621 = vmatprep.subr.mxu0 0.0
    %622 = vmatpush1.msra.mxu0 0.0
    %623 = vmatprep.subr.mxu0 0.0
    %624 = vmatpush1.msra.mxu0 0.0
    %625 = vmatprep.subr.mxu0 0.0
    %626 = vmatpush1.msra.mxu0 0.0
    %627 = vmatprep.subr.mxu0 0.0
    %628 = vmatpush1.msra.mxu0 0.0
    %629 = vmatprep.subr.mxu0 0.0
    %630 = vmatpush1.msra.mxu0 0.0
    %631 = vmatprep.mubr.f32.mxu0 0.0
    %632 = vmatmul.mubr.f32.gmra.mrb[0].mxu0 %v556
    %v633 = vpop.f32.mrb[0].mxu0
    %v634 = vadd.f32 %v537, %v633
    %v635 = vpop.f32.mrb[0].mxu0
    %636 = vmatprep.mubr.f32.mxu0 0.0
    %637 = vmatmul.mubr.f32.gmra.mrb[0].mxu0 %v559
    %v638 = vpop.f32.mrb[0].mxu0
    %v639 = vadd.f32 %v542, %v638
    %v640 = vpop.f32.mrb[0].mxu0
    %641 = vmatprep.mubr.f32.mxu0 0.0
    %642 = vmatmul.mubr.f32.gmra.mrb[0].mxu0 %v562
    %v643 = vpop.f32.mrb[0].mxu0
    %v644 = vadd.f32 %v547, %v643
    %v645 = vpop.f32.mrb[0].mxu0
    %646 = vmatprep.mubr.f32.mxu0 0.0
    %647 = vmatmul.mubr.f32.gmra.mrb[0].mxu0 %v565
    %v648 = vpop.f32.mrb[0].mxu0
    %v649 = vadd.f32 %v552, %v648
    %v650 = vpop.f32.mrb[0].mxu0
    %651 = vdwg.mxu0
    %v652 = vand.u32 2147483647, %v634
    %vm653 = vcmp.le.f32.partialorder %v652, 0.7853982
    %vm654 = vcmp.lt.s32.totalorder %v634, 0
    %v655 = vand.u32 %v634, 2139095040
    %v656 = vshrl.u32 %v655, 23
    %v657 = vsub.s32 %v656, 127
    %v658 = vand.u32 2147483647, %v634
    %v659 = vand.u32 %v658, 8388607
    %v660 = vor.u32 %v659, 8388608
    %v661 = vsub.s32 0, %v660
    %v662 = vadd.s32 %v657, 1
    %vm663 = vcmp.gt.s32.totalorder %v662, 0
    %v664 = vsel %vm663, %v662, 0
    %v665 = vshrl.u32 %v664, 5
    %v666 = vand.u32 %v664, 31
    %v667 = vsub.s32 32, %v666
    %v668 = vshrl.u32 683565275, %v667
    %v669 = vshll.u32 683565275, %v666
    %v670 = vshrl.u32 2475754826, %v667
    %v671 = vor.u32 %v669, %v670
    %v672 = vshll.u32 2475754826, %v666
    %v673 = vshrl.u32 2131351028, %v667
    %v674 = vor.u32 %v672, %v673
    %v675 = vshll.u32 2131351028, %v666
    %v676 = vshrl.u32 2102212464, %v667
    %v677 = vor.u32 %v675, %v676
    %v678 = vshll.u32 2102212464, %v666
    %v679 = vshrl.u32 920167782, %v667
    %v680 = vor.u32 %v678, %v679
    %v681 = vshll.u32 920167782, %v666
    %v682 = vshrl.u32 1326507024, %v667
    %v683 = vor.u32 %v681, %v682
    %vm684 = vcmp.lt.s32.totalorder %v665, 1
    %vm685 = vcmp.lt.s32.totalorder %v665, 2
    %vm686 = vcmp.lt.s32.totalorder %v665, 3
    %vm687 = vcmp.lt.s32.totalorder %v665, 4
    %v688 = vsel %vm684, %v668, %v671
    %v689 = vsel %vm687, %v677, 2102212464
    %v690 = vsel %vm686, %v674, %v689
    %v691 = vsel %vm685, %v688, %v690
    %v692 = vsel %vm684, %v671, %v674
    %v693 = vsel %vm687, %v680, 920167782
    %v694 = vsel %vm686, %v677, %v693
    %v695 = vsel %vm685, %v692, %v694
    %v696 = vsel %vm684, %v674, %v677
    %v697 = vsel %vm687, %v683, 1326507024
    %v698 = vsel %vm686, %v680, %v697
    %v699 = vsel %vm685, %v696, %v698
    %v700 = vshll.u32 %v660, 8
    %v701 = vmul.u32.u64.compose %v700, %v699
    %v702 = vextract.low.u32 %v701
    %v703 = vextract.high.u32 %v701
    %v704 = vmul.u32.u64.compose %v700, %v695
    %v705 = vextract.low.u32 %v704
    %v706 = vextract.high.u32 %v704
    %v707 = vmul.u32 %v700, %v691
    %v708 = vadd.s32 %v703, %v705
    %vm709 = vc.u32 %v703, %v705
    %v710 = vadd.s32 %v706, 1
    %v711 = vsel %vm709, %v710, %v706
    %v712 = vadd.s32 %v707, %v711
    %v713 = vadd.s32 %v712, 536870912
    %v714 = vshrl.u32 %v713, 30
    %v715 = vshll.u32 %v714, 30
    %v716 = vsub.s32 %v712, %v715
    %vm717 = vcmp.lt.s32.totalorder %v716, 0
    %v718 = vsub.s32 0, %v716
    %v719 = vsel %vm717, %v718, %v716
    %v720 = vclz %v719
    %v721 = vsub.s32 %v720, 2
    %vm722 = vcmp.gt.s32.totalorder 0, %v721
    %v723 = vsel %vm722, 0, %v721
    %v724 = vsub.s32 32, %v723
    %v725 = vshll.u32 %v716, %v723
    %v726 = vshrl.u32 %v708, %v724
    %v727 = vor.u32 %v725, %v726
    %v728 = vsub.s32 4294967266, %v723
    %v729 = vadd.s32 %v728, 127
    %v730 = vshll.u32 %v729, 23
    %v731 = vor.u32 4788187, %v730
    %v732 = vand.u32 2147483647, %v731
    %v734 = vcvt.s32.f32 %v727
    %v735 = vmul.f32 %v734, %v732
    %v736 = vxor.u32 %v735, 2147483648
    %v737 = vsel %vm654, %v736, %v735
    %v738 = vsub.s32 4, %v714
    %v739 = vsel %vm654, %v738, %v714
    %v740 = vsel %vm653, %v634, %v737
    %v741 = vsel %vm653, 0, %v739
    %v742 = vcosq.f32.pop %v740
    %v743 = vsinq.f32.pop %v740
    %vm744 = vweird.f32 %v634
    %v745 = vadd.s32 %v741, 3
    %v746 = vand.u32 %v745, 3
    %vm747 = vcmp.lt.s32.totalorder %v746, 2
    %vm748 = vcmp.eq.s32.totalorder %v746, 0
    %v749 = vxor.u32 %v743, 2147483648
    %v750 = vsel %vm748, %v742, %v749
    %vm751 = vcmp.eq.s32.totalorder %v746, 2
    %v752 = vxor.u32 %v742, 2147483648
    %v753 = vsel %vm751, %v752, %v743
    %v754 = vsel %vm747, %v750, %v753
    %v755 = vsel %vm744, nan, %v754
    %v756 = vand.u32 2147483647, %v639
    %vm757 = vcmp.le.f32.partialorder %v756, 0.7853982
    %vm758 = vcmp.lt.s32.totalorder %v639, 0
    %v759 = vand.u32 %v639, 2139095040
    %v760 = vshrl.u32 %v759, 23
    %v761 = vsub.s32 %v760, 127
    %v762 = vand.u32 2147483647, %v639
    %v763 = vand.u32 %v762, 8388607
    %v764 = vor.u32 %v763, 8388608
    %v765 = vsub.s32 0, %v764
    %v766 = vadd.s32 %v761, 1
    %vm767 = vcmp.gt.s32.totalorder %v766, 0
    %v768 = vsel %vm767, %v766, 0
    %v769 = vshrl.u32 %v768, 5
    %v770 = vand.u32 %v768, 31
    %v771 = vsub.s32 32, %v770
    %v772 = vshrl.u32 683565275, %v771
    %v773 = vshll.u32 683565275, %v770
    %v774 = vshrl.u32 2475754826, %v771
    %v775 = vor.u32 %v773, %v774
    %v776 = vshll.u32 2475754826, %v770
    %v777 = vshrl.u32 2131351028, %v771
    %v778 = vor.u32 %v776, %v777
    %v779 = vshll.u32 2131351028, %v770
    %v780 = vshrl.u32 2102212464, %v771
    %v781 = vor.u32 %v779, %v780
    %v782 = vshll.u32 2102212464, %v770
    %v783 = vshrl.u32 920167782, %v771
    %v784 = vor.u32 %v782, %v783
    %v785 = vshll.u32 920167782, %v770
    %v786 = vshrl.u32 1326507024, %v771
    %v787 = vor.u32 %v785, %v786
    %vm788 = vcmp.lt.s32.totalorder %v769, 1
    %vm789 = vcmp.lt.s32.totalorder %v769, 2
    %vm790 = vcmp.lt.s32.totalorder %v769, 3
    %vm791 = vcmp.lt.s32.totalorder %v769, 4
    %v792 = vsel %vm788, %v772, %v775
    %v793 = vsel %vm791, %v781, 2102212464
    %v794 = vsel %vm790, %v778, %v793
    %v795 = vsel %vm789, %v792, %v794
    %v796 = vsel %vm788, %v775, %v778
    %v797 = vsel %vm791, %v784, 920167782
    %v798 = vsel %vm790, %v781, %v797
    %v799 = vsel %vm789, %v796, %v798
    %v800 = vsel %vm788, %v778, %v781
    %v801 = vsel %vm791, %v787, 1326507024
    %v802 = vsel %vm790, %v784, %v801
    %v803 = vsel %vm789, %v800, %v802
    %v804 = vshll.u32 %v764, 8
    %v805 = vmul.u32.u64.compose %v804, %v803
    %v806 = vextract.low.u32 %v805
    %v807 = vextract.high.u32 %v805
    %v808 = vmul.u32.u64.compose %v804, %v799
    %v809 = vextract.low.u32 %v808
    %v810 = vextract.high.u32 %v808
    %v811 = vmul.u32 %v804, %v795
    %v812 = vadd.s32 %v807, %v809
    %vm813 = vc.u32 %v807, %v809
    %v814 = vadd.s32 %v810, 1
    %v815 = vsel %vm813, %v814, %v810
    %v816 = vadd.s32 %v811, %v815
    %v817 = vadd.s32 %v816, 536870912
    %v818 = vshrl.u32 %v817, 30
    %v819 = vshll.u32 %v818, 30
    %v820 = vsub.s32 %v816, %v819
    %vm821 = vcmp.lt.s32.totalorder %v820, 0
    %v822 = vsub.s32 0, %v820
    %v823 = vsel %vm821, %v822, %v820
    %v824 = vclz %v823
    %v825 = vsub.s32 %v824, 2
    %vm826 = vcmp.gt.s32.totalorder 0, %v825
    %v827 = vsel %vm826, 0, %v825
    %v828 = vsub.s32 32, %v827
    %v829 = vshll.u32 %v820, %v827
    %v830 = vshrl.u32 %v812, %v828
    %v831 = vor.u32 %v829, %v830
    %v832 = vsub.s32 4294967266, %v827
    %v833 = vadd.s32 %v832, 127
    %v834 = vshll.u32 %v833, 23
    %v835 = vor.u32 4788187, %v834
    %v836 = vand.u32 2147483647, %v835
    %v838 = vcvt.s32.f32 %v831
    %v839 = vmul.f32 %v838, %v836
    %v840 = vxor.u32 %v839, 2147483648
    %v841 = vsel %vm758, %v840, %v839
    %v842 = vsub.s32 4, %v818
    %v843 = vsel %vm758, %v842, %v818
    %v844 = vsel %vm757, %v639, %v841
    %v845 = vsel %vm757, 0, %v843
    %v846 = vcosq.f32.pop %v844
    %v847 = vsinq.f32.pop %v844
    %vm848 = vweird.f32 %v639
    %v849 = vadd.s32 %v845, 3
    %v850 = vand.u32 %v849, 3
    %vm851 = vcmp.lt.s32.totalorder %v850, 2
    %vm852 = vcmp.eq.s32.totalorder %v850, 0
    %v853 = vxor.u32 %v847, 2147483648
    %v854 = vsel %vm852, %v846, %v853
    %vm855 = vcmp.eq.s32.totalorder %v850, 2
    %v856 = vxor.u32 %v846, 2147483648
    %v857 = vsel %vm855, %v856, %v847
    %v858 = vsel %vm851, %v854, %v857
    %v859 = vsel %vm848, nan, %v858
    %v860 = vand.u32 2147483647, %v644
    %vm861 = vcmp.le.f32.partialorder %v860, 0.7853982
    %vm862 = vcmp.lt.s32.totalorder %v644, 0
    %v863 = vand.u32 %v644, 2139095040
    %v864 = vshrl.u32 %v863, 23
    %v865 = vsub.s32 %v864, 127
    %v866 = vand.u32 2147483647, %v644
    %v867 = vand.u32 %v866, 8388607
    %v868 = vor.u32 %v867, 8388608
    %v869 = vsub.s32 0, %v868
    %v870 = vadd.s32 %v865, 1
    %vm871 = vcmp.gt.s32.totalorder %v870, 0
    %v872 = vsel %vm871, %v870, 0
    %v873 = vshrl.u32 %v872, 5
    %v874 = vand.u32 %v872, 31
    %v875 = vsub.s32 32, %v874
    %v876 = vshrl.u32 683565275, %v875
    %v877 = vshll.u32 683565275, %v874
    %v878 = vshrl.u32 2475754826, %v875
    %v879 = vor.u32 %v877, %v878
    %v880 = vshll.u32 2475754826, %v874
    %v881 = vshrl.u32 2131351028, %v875
    %v882 = vor.u32 %v880, %v881
    %v883 = vshll.u32 2131351028, %v874
    %v884 = vshrl.u32 2102212464, %v875
    %v885 = vor.u32 %v883, %v884
    %v886 = vshll.u32 2102212464, %v874
    %v887 = vshrl.u32 920167782, %v875
    %v888 = vor.u32 %v886, %v887
    %v889 = vshll.u32 920167782, %v874
    %v890 = vshrl.u32 1326507024, %v875
    %v891 = vor.u32 %v889, %v890
    %vm892 = vcmp.lt.s32.totalorder %v873, 1
    %vm893 = vcmp.lt.s32.totalorder %v873, 2
    %vm894 = vcmp.lt.s32.totalorder %v873, 3
    %vm895 = vcmp.lt.s32.totalorder %v873, 4
    %v896 = vsel %vm892, %v876, %v879
    %v897 = vsel %vm895, %v885, 2102212464
    %v898 = vsel %vm894, %v882, %v897
    %v899 = vsel %vm893, %v896, %v898
    %v900 = vsel %vm892, %v879, %v882
    %v901 = vsel %vm895, %v888, 920167782
    %v902 = vsel %vm894, %v885, %v901
    %v903 = vsel %vm893, %v900, %v902
    %v904 = vsel %vm892, %v882, %v885
    %v905 = vsel %vm895, %v891, 1326507024
    %v906 = vsel %vm894, %v888, %v905
    %v907 = vsel %vm893, %v904, %v906
    %v908 = vshll.u32 %v868, 8
    %v909 = vmul.u32.u64.compose %v908, %v907
    %v910 = vextract.low.u32 %v909
    %v911 = vextract.high.u32 %v909
    %v912 = vmul.u32.u64.compose %v908, %v903
    %v913 = vextract.low.u32 %v912
    %v914 = vextract.high.u32 %v912
    %v915 = vmul.u32 %v908, %v899
    %v916 = vadd.s32 %v911, %v913
    %vm917 = vc.u32 %v911, %v913
    %v918 = vadd.s32 %v914, 1
    %v919 = vsel %vm917, %v918, %v914
    %v920 = vadd.s32 %v915, %v919
    %v921 = vadd.s32 %v920, 536870912
    %v922 = vshrl.u32 %v921, 30
    %v923 = vshll.u32 %v922, 30
    %v924 = vsub.s32 %v920, %v923
    %vm925 = vcmp.lt.s32.totalorder %v924, 0
    %v926 = vsub.s32 0, %v924
    %v927 = vsel %vm925, %v926, %v924
    %v928 = vclz %v927
    %v929 = vsub.s32 %v928, 2
    %vm930 = vcmp.gt.s32.totalorder 0, %v929
    %v931 = vsel %vm930, 0, %v929
    %v932 = vsub.s32 32, %v931
    %v933 = vshll.u32 %v924, %v931
    %v934 = vshrl.u32 %v916, %v932
    %v935 = vor.u32 %v933, %v934
    %v936 = vsub.s32 4294967266, %v931
    %v937 = vadd.s32 %v936, 127
    %v938 = vshll.u32 %v937, 23
    %v939 = vor.u32 4788187, %v938
    %v940 = vand.u32 2147483647, %v939
    %v942 = vcvt.s32.f32 %v935
    %v943 = vmul.f32 %v942, %v940
    %v944 = vxor.u32 %v943, 2147483648
    %v945 = vsel %vm862, %v944, %v943
    %v946 = vsub.s32 4, %v922
    %v947 = vsel %vm862, %v946, %v922
    %v948 = vsel %vm861, %v644, %v945
    %v949 = vsel %vm861, 0, %v947
    %v950 = vcosq.f32.pop %v948
    %v951 = vsinq.f32.pop %v948
    %vm952 = vweird.f32 %v644
    %v953 = vadd.s32 %v949, 3
    %v954 = vand.u32 %v953, 3
    %vm955 = vcmp.lt.s32.totalorder %v954, 2
    %vm956 = vcmp.eq.s32.totalorder %v954, 0
    %v957 = vxor.u32 %v951, 2147483648
    %v958 = vsel %vm956, %v950, %v957
    %vm959 = vcmp.eq.s32.totalorder %v954, 2
    %v960 = vxor.u32 %v950, 2147483648
    %v961 = vsel %vm959, %v960, %v951
    %v962 = vsel %vm955, %v958, %v961
    %v963 = vsel %vm952, nan, %v962
    %v964 = vand.u32 2147483647, %v649
    %vm965 = vcmp.le.f32.partialorder %v964, 0.7853982
    %vm966 = vcmp.lt.s32.totalorder %v649, 0
    %v967 = vand.u32 %v649, 2139095040
    %v968 = vshrl.u32 %v967, 23
    %v969 = vsub.s32 %v968, 127
    %v970 = vand.u32 2147483647, %v649
    %v971 = vand.u32 %v970, 8388607
    %v972 = vor.u32 %v971, 8388608
    %v973 = vsub.s32 0, %v972
    %v974 = vadd.s32 %v969, 1
    %vm975 = vcmp.gt.s32.totalorder %v974, 0
    %v976 = vsel %vm975, %v974, 0
    %v977 = vshrl.u32 %v976, 5
    %v978 = vand.u32 %v976, 31
    %v979 = vsub.s32 32, %v978
    %v980 = vshrl.u32 683565275, %v979
    %v981 = vshll.u32 683565275, %v978
    %v982 = vshrl.u32 2475754826, %v979
    %v983 = vor.u32 %v981, %v982
    %v984 = vshll.u32 2475754826, %v978
    %v985 = vshrl.u32 2131351028, %v979
    %v986 = vor.u32 %v984, %v985
    %v987 = vshll.u32 2131351028, %v978
    %v988 = vshrl.u32 2102212464, %v979
    %v989 = vor.u32 %v987, %v988
    %v990 = vshll.u32 2102212464, %v978
    %v991 = vshrl.u32 920167782, %v979
    %v992 = vor.u32 %v990, %v991
    %v993 = vshll.u32 920167782, %v978
    %v994 = vshrl.u32 1326507024, %v979
    %v995 = vor.u32 %v993, %v994
    %vm996 = vcmp.lt.s32.totalorder %v977, 1
    %vm997 = vcmp.lt.s32.totalorder %v977, 2
    %vm998 = vcmp.lt.s32.totalorder %v977, 3
    %vm999 = vcmp.lt.s32.totalorder %v977, 4
    %v1000 = vsel %vm996, %v980, %v983
    %v1001 = vsel %vm999, %v989, 2102212464
    %v1002 = vsel %vm998, %v986, %v1001
    %v1003 = vsel %vm997, %v1000, %v1002
    %v1004 = vsel %vm996, %v983, %v986
    %v1005 = vsel %vm999, %v992, 920167782
    %v1006 = vsel %vm998, %v989, %v1005
    %v1007 = vsel %vm997, %v1004, %v1006
    %v1008 = vsel %vm996, %v986, %v989
    %v1009 = vsel %vm999, %v995, 1326507024
    %v1010 = vsel %vm998, %v992, %v1009
    %v1011 = vsel %vm997, %v1008, %v1010
    %v1012 = vshll.u32 %v972, 8
    %v1013 = vmul.u32.u64.compose %v1012, %v1011
    %v1014 = vextract.low.u32 %v1013
    %v1015 = vextract.high.u32 %v1013
    %v1016 = vmul.u32.u64.compose %v1012, %v1007
    %v1017 = vextract.low.u32 %v1016
    %v1018 = vextract.high.u32 %v1016
    %v1019 = vmul.u32 %v1012, %v1003
    %v1020 = vadd.s32 %v1015, %v1017
    %vm1021 = vc.u32 %v1015, %v1017
    %v1022 = vadd.s32 %v1018, 1
    %v1023 = vsel %vm1021, %v1022, %v1018
    %v1024 = vadd.s32 %v1019, %v1023
    %v1025 = vadd.s32 %v1024, 536870912
    %v1026 = vshrl.u32 %v1025, 30
    %v1027 = vshll.u32 %v1026, 30
    %v1028 = vsub.s32 %v1024, %v1027
    %vm1029 = vcmp.lt.s32.totalorder %v1028, 0
    %v1030 = vsub.s32 0, %v1028
    %v1031 = vsel %vm1029, %v1030, %v1028
    %v1032 = vclz %v1031
    %v1033 = vsub.s32 %v1032, 2
    %vm1034 = vcmp.gt.s32.totalorder 0, %v1033
    %v1035 = vsel %vm1034, 0, %v1033
    %v1036 = vsub.s32 32, %v1035
    %v1037 = vshll.u32 %v1028, %v1035
    %v1038 = vshrl.u32 %v1020, %v1036
    %v1039 = vor.u32 %v1037, %v1038
    %v1040 = vsub.s32 4294967266, %v1035
    %v1041 = vadd.s32 %v1040, 127
    %v1042 = vshll.u32 %v1041, 23
    %v1043 = vor.u32 4788187, %v1042
    %v1044 = vand.u32 2147483647, %v1043
    %v1046 = vcvt.s32.f32 %v1039
    %v1047 = vmul.f32 %v1046, %v1044
    %v1048 = vxor.u32 %v1047, 2147483648
    %v1049 = vsel %vm966, %v1048, %v1047
    %v1050 = vsub.s32 4, %v1026
    %v1051 = vsel %vm966, %v1050, %v1026
    %v1052 = vsel %vm965, %v649, %v1049
    %v1053 = vsel %vm965, 0, %v1051
    %v1054 = vcosq.f32.pop %v1052
    %v1055 = vsinq.f32.pop %v1052
    %vm1056 = vweird.f32 %v649
    %v1057 = vadd.s32 %v1053, 3
    %v1058 = vand.u32 %v1057, 3
    %vm1059 = vcmp.lt.s32.totalorder %v1058, 2
    %vm1060 = vcmp.eq.s32.totalorder %v1058, 0
    %v1061 = vxor.u32 %v1055, 2147483648
    %v1062 = vsel %vm1060, %v1054, %v1061
    %vm1063 = vcmp.eq.s32.totalorder %v1058, 2
    %v1064 = vxor.u32 %v1054, 2147483648
    %v1065 = vsel %vm1063, %v1064, %v1055
    %v1066 = vsel %vm1059, %v1062, %v1065
    %v1067 = vsel %vm1056, nan, %v1066
    %v1068 = vld [vmem:[%s5] sm:$0xff]
    %v1069 = vld [vmem:[%s5 + $0x8] sm:$0xff]
    %v1070 = vld [vmem:[%s5 + $0x10] sm:$0xff]
    %v1071 = vld [vmem:[%s5 + $0x18] sm:$0xff]
    %v1072 = vld [vmem:[%s6] sm:$0xff]
    %v1073 = vld [vmem:[%s6 + $0x8] sm:$0xff]
    %v1074 = vld [vmem:[%s6 + $0x10] sm:$0xff]
    %v1075 = vld [vmem:[%s6 + $0x18] sm:$0xff]
    %1077 = vset.pattern.permute.xlu0 0
    %1078 = vperm.xlu0 %1077, %v1072
    %v1079 = vpop.permute.xlu0 %1078
    %1082 = vset.pattern.permute.xlu0 0
    %1083 = vperm.xlu0 %1082, %v1073
    %v1084 = vpop.permute.xlu0 %1083
    %1087 = vset.pattern.permute.xlu0 0
    %1088 = vperm.xlu0 %1087, %v1074
    %v1089 = vpop.permute.xlu0 %1088
    %1092 = vset.pattern.permute.xlu0 0
    %1093 = vperm.xlu0 %1092, %v1075
    %v1094 = vpop.permute.xlu0 %1093
    %v1097 = vsel %vm554, %v1068, 0
    %v1100 = vsel %vm554, %v1069, 0
    %v1103 = vsel %vm554, %v1070, 0
    %v1106 = vsel %vm554, %v1071, 0
    %1108 = vmatprep.subr.mxu0 0.0
    %1109 = vmatpush1.msra.mxu0 %v755
    %1110 = vmatprep.subr.mxu0 0.0
    %1111 = vmatpush1.msra.mxu0 %v859
    %1112 = vmatprep.subr.mxu0 0.0
    %1113 = vmatpush1.msra.mxu0 %v963
    %1114 = vmatprep.subr.mxu0 0.0
    %1115 = vmatpush1.msra.mxu0 %v1067
    %1116 = vmatprep.subr.mxu0 0.0
    %1117 = vmatpush1.msra.mxu0 0.0
    %1118 = vmatprep.subr.mxu0 0.0
    %1119 = vmatpush1.msra.mxu0 0.0
    %1120 = vmatprep.subr.mxu0 0.0
    %1121 = vmatpush1.msra.mxu0 0.0
    %1122 = vmatprep.subr.mxu0 0.0
    %1123 = vmatpush1.msra.mxu0 0.0
    %1124 = vmatprep.subr.mxu0 0.0
    %1125 = vmatpush1.msra.mxu0 0.0
    %1126 = vmatprep.subr.mxu0 0.0
    %1127 = vmatpush1.msra.mxu0 0.0
    %1128 = vmatprep.subr.mxu0 0.0
    %1129 = vmatpush1.msra.mxu0 0.0
    %1130 = vmatprep.subr.mxu0 0.0
    %1131 = vmatpush1.msra.mxu0 0.0
    %1132 = vmatprep.subr.mxu0 0.0
    %1133 = vmatpush1.msra.mxu0 0.0
    %1134 = vmatprep.subr.mxu0 0.0
    %1135 = vmatpush1.msra.mxu0 0.0
    %1136 = vmatprep.subr.mxu0 0.0
    %1137 = vmatpush1.msra.mxu0 0.0
    %1138 = vmatprep.subr.mxu0 0.0
    %1139 = vmatpush1.msra.mxu0 0.0
    %1140 = vmatprep.subr.mxu0 0.0
    %1141 = vmatpush1.msra.mxu0 0.0
    %1142 = vmatprep.subr.mxu0 0.0
    %1143 = vmatpush1.msra.mxu0 0.0
    %1144 = vmatprep.subr.mxu0 0.0
    %1145 = vmatpush1.msra.mxu0 0.0
    %1146 = vmatprep.subr.mxu0 0.0
    %1147 = vmatpush1.msra.mxu0 0.0
    %1148 = vmatprep.subr.mxu0 0.0
    %1149 = vmatpush1.msra.mxu0 0.0
    %1150 = vmatprep.subr.mxu0 0.0
    %1151 = vmatpush1.msra.mxu0 0.0
    %1152 = vmatprep.subr.mxu0 0.0
    %1153 = vmatpush1.msra.mxu0 0.0
    %1154 = vmatprep.subr.mxu0 0.0
    %1155 = vmatpush1.msra.mxu0 0.0
    %1156 = vmatprep.subr.mxu0 0.0
    %1157 = vmatpush1.msra.mxu0 0.0
    %1158 = vmatprep.subr.mxu0 0.0
    %1159 = vmatpush1.msra.mxu0 0.0
    %1160 = vmatprep.subr.mxu0 0.0
    %1161 = vmatpush1.msra.mxu0 0.0
    %1162 = vmatprep.subr.mxu0 0.0
    %1163 = vmatpush1.msra.mxu0 0.0
    %1164 = vmatprep.subr.mxu0 0.0
    %1165 = vmatpush1.msra.mxu0 0.0
    %1166 = vmatprep.subr.mxu0 0.0
    %1167 = vmatpush1.msra.mxu0 0.0
    %1168 = vmatprep.subr.mxu0 0.0
    %1169 = vmatpush1.msra.mxu0 0.0
    %1170 = vmatprep.subr.mxu0 0.0
    %1171 = vmatpush1.msra.mxu0 0.0
    %1172 = vmatprep.mubr.f32.mxu0 0.0
    %1173 = vmatmul.mubr.f32.gmra.mrb[0].mxu0 %v1097
    %v1174 = vpop.f32.mrb[0].mxu0
    %v1175 = vadd.f32 %v1079, %v1174
    %v1176 = vpop.f32.mrb[0].mxu0
    %1177 = vmatprep.mubr.f32.mxu0 0.0
    %1178 = vmatmul.mubr.f32.gmra.mrb[0].mxu0 %v1100
    %v1179 = vpop.f32.mrb[0].mxu0
    %v1180 = vadd.f32 %v1084, %v1179
    %v1181 = vpop.f32.mrb[0].mxu0
    %1182 = vmatprep.mubr.f32.mxu0 0.0
    %1183 = vmatmul.mubr.f32.gmra.mrb[0].mxu0 %v1103
    %v1184 = vpop.f32.mrb[0].mxu0
    %v1185 = vadd.f32 %v1089, %v1184
    %v1186 = vpop.f32.mrb[0].mxu0
    %1187 = vmatprep.mubr.f32.mxu0 0.0
    %1188 = vmatmul.mubr.f32.gmra.mrb[0].mxu0 %v1106
    %v1189 = vpop.f32.mrb[0].mxu0
    %v1190 = vadd.f32 %v1094, %v1189
    %v1191 = vpop.f32.mrb[0].mxu0
    %1192 = vdwg.mxu0
    %v1193 = vand.u32 2147483647, %v1175
    %vm1194 = vcmp.le.f32.partialorder %v1193, 0.7853982
    %vm1195 = vcmp.lt.s32.totalorder %v1175, 0
    %v1196 = vand.u32 %v1175, 2139095040
    %v1197 = vshrl.u32 %v1196, 23
    %v1198 = vsub.s32 %v1197, 127
    %v1199 = vand.u32 2147483647, %v1175
    %v1200 = vand.u32 %v1199, 8388607
    %v1201 = vor.u32 %v1200, 8388608
    %v1202 = vsub.s32 0, %v1201
    %v1203 = vadd.s32 %v1198, 1
    %vm1204 = vcmp.gt.s32.totalorder %v1203, 0
    %v1205 = vsel %vm1204, %v1203, 0
    %v1206 = vshrl.u32 %v1205, 5
    %v1207 = vand.u32 %v1205, 31
    %v1208 = vsub.s32 32, %v1207
    %v1209 = vshrl.u32 683565275, %v1208
    %v1210 = vshll.u32 683565275, %v1207
    %v1211 = vshrl.u32 2475754826, %v1208
    %v1212 = vor.u32 %v1210, %v1211
    %v1213 = vshll.u32 2475754826, %v1207
    %v1214 = vshrl.u32 2131351028, %v1208
    %v1215 = vor.u32 %v1213, %v1214
    %v1216 = vshll.u32 2131351028, %v1207
    %v1217 = vshrl.u32 2102212464, %v1208
    %v1218 = vor.u32 %v1216, %v1217
    %v1219 = vshll.u32 2102212464, %v1207
    %v1220 = vshrl.u32 920167782, %v1208
    %v1221 = vor.u32 %v1219, %v1220
    %v1222 = vshll.u32 920167782, %v1207
    %v1223 = vshrl.u32 1326507024, %v1208
    %v1224 = vor.u32 %v1222, %v1223
    %vm1225 = vcmp.lt.s32.totalorder %v1206, 1
    %vm1226 = vcmp.lt.s32.totalorder %v1206, 2
    %vm1227 = vcmp.lt.s32.totalorder %v1206, 3
    %vm1228 = vcmp.lt.s32.totalorder %v1206, 4
    %v1229 = vsel %vm1225, %v1209, %v1212
    %v1230 = vsel %vm1228, %v1218, 2102212464
    %v1231 = vsel %vm1227, %v1215, %v1230
    %v1232 = vsel %vm1226, %v1229, %v1231
    %v1233 = vsel %vm1225, %v1212, %v1215
    %v1234 = vsel %vm1228, %v1221, 920167782
    %v1235 = vsel %vm1227, %v1218, %v1234
    %v1236 = vsel %vm1226, %v1233, %v1235
    %v1237 = vsel %vm1225, %v1215, %v1218
    %v1238 = vsel %vm1228, %v1224, 1326507024
    %v1239 = vsel %vm1227, %v1221, %v1238
    %v1240 = vsel %vm1226, %v1237, %v1239
    %v1241 = vshll.u32 %v1201, 8
    %v1242 = vmul.u32.u64.compose %v1241, %v1240
    %v1243 = vextract.low.u32 %v1242
    %v1244 = vextract.high.u32 %v1242
    %v1245 = vmul.u32.u64.compose %v1241, %v1236
    %v1246 = vextract.low.u32 %v1245
    %v1247 = vextract.high.u32 %v1245
    %v1248 = vmul.u32 %v1241, %v1232
    %v1249 = vadd.s32 %v1244, %v1246
    %vm1250 = vc.u32 %v1244, %v1246
    %v1251 = vadd.s32 %v1247, 1
    %v1252 = vsel %vm1250, %v1251, %v1247
    %v1253 = vadd.s32 %v1248, %v1252
    %v1254 = vadd.s32 %v1253, 536870912
    %v1255 = vshrl.u32 %v1254, 30
    %v1256 = vshll.u32 %v1255, 30
    %v1257 = vsub.s32 %v1253, %v1256
    %vm1258 = vcmp.lt.s32.totalorder %v1257, 0
    %v1259 = vsub.s32 0, %v1257
    %v1260 = vsel %vm1258, %v1259, %v1257
    %v1261 = vclz %v1260
    %v1262 = vsub.s32 %v1261, 2
    %vm1263 = vcmp.gt.s32.totalorder 0, %v1262
    %v1264 = vsel %vm1263, 0, %v1262
    %v1265 = vsub.s32 32, %v1264
    %v1266 = vshll.u32 %v1257, %v1264
    %v1267 = vshrl.u32 %v1249, %v1265
    %v1268 = vor.u32 %v1266, %v1267
    %v1269 = vsub.s32 4294967266, %v1264
    %v1270 = vadd.s32 %v1269, 127
    %v1271 = vshll.u32 %v1270, 23
    %v1272 = vor.u32 4788187, %v1271
    %v1273 = vand.u32 2147483647, %v1272
    %v1275 = vcvt.s32.f32 %v1268
    %v1276 = vmul.f32 %v1275, %v1273
    %v1277 = vxor.u32 %v1276, 2147483648
    %v1278 = vsel %vm1195, %v1277, %v1276
    %v1279 = vsub.s32 4, %v1255
    %v1280 = vsel %vm1195, %v1279, %v1255
    %v1281 = vsel %vm1194, %v1175, %v1278
    %v1282 = vsel %vm1194, 0, %v1280
    %v1283 = vcosq.f32.pop %v1281
    %v1284 = vsinq.f32.pop %v1281
    %vm1285 = vweird.f32 %v1175
    %v1286 = vadd.s32 %v1282, 3
    %v1287 = vand.u32 %v1286, 3
    %vm1288 = vcmp.lt.s32.totalorder %v1287, 2
    %vm1289 = vcmp.eq.s32.totalorder %v1287, 0
    %v1290 = vxor.u32 %v1284, 2147483648
    %v1291 = vsel %vm1289, %v1283, %v1290
    %vm1292 = vcmp.eq.s32.totalorder %v1287, 2
    %v1293 = vxor.u32 %v1283, 2147483648
    %v1294 = vsel %vm1292, %v1293, %v1284
    %v1295 = vsel %vm1288, %v1291, %v1294
    %v1296 = vsel %vm1285, nan, %v1295
    %v1297 = vand.u32 2147483647, %v1180
    %vm1298 = vcmp.le.f32.partialorder %v1297, 0.7853982
    %vm1299 = vcmp.lt.s32.totalorder %v1180, 0
    %v1300 = vand.u32 %v1180, 2139095040
    %v1301 = vshrl.u32 %v1300, 23
    %v1302 = vsub.s32 %v1301, 127
    %v1303 = vand.u32 2147483647, %v1180
    %v1304 = vand.u32 %v1303, 8388607
    %v1305 = vor.u32 %v1304, 8388608
    %v1306 = vsub.s32 0, %v1305
    %v1307 = vadd.s32 %v1302, 1
    %vm1308 = vcmp.gt.s32.totalorder %v1307, 0
    %v1309 = vsel %vm1308, %v1307, 0
    %v1310 = vshrl.u32 %v1309, 5
    %v1311 = vand.u32 %v1309, 31
    %v1312 = vsub.s32 32, %v1311
    %v1313 = vshrl.u32 683565275, %v1312
    %v1314 = vshll.u32 683565275, %v1311
    %v1315 = vshrl.u32 2475754826, %v1312
    %v1316 = vor.u32 %v1314, %v1315
    %v1317 = vshll.u32 2475754826, %v1311
    %v1318 = vshrl.u32 2131351028, %v1312
    %v1319 = vor.u32 %v1317, %v1318
    %v1320 = vshll.u32 2131351028, %v1311
    %v1321 = vshrl.u32 2102212464, %v1312
    %v1322 = vor.u32 %v1320, %v1321
    %v1323 = vshll.u32 2102212464, %v1311
    %v1324 = vshrl.u32 920167782, %v1312
    %v1325 = vor.u32 %v1323, %v1324
    %v1326 = vshll.u32 920167782, %v1311
    %v1327 = vshrl.u32 1326507024, %v1312
    %v1328 = vor.u32 %v1326, %v1327
    %vm1329 = vcmp.lt.s32.totalorder %v1310, 1
    %vm1330 = vcmp.lt.s32.totalorder %v1310, 2
    %vm1331 = vcmp.lt.s32.totalorder %v1310, 3
    %vm1332 = vcmp.lt.s32.totalorder %v1310, 4
    %v1333 = vsel %vm1329, %v1313, %v1316
    %v1334 = vsel %vm1332, %v1322, 2102212464
    %v1335 = vsel %vm1331, %v1319, %v1334
    %v1336 = vsel %vm1330, %v1333, %v1335
    %v1337 = vsel %vm1329, %v1316, %v1319
    %v1338 = vsel %vm1332, %v1325, 920167782
    %v1339 = vsel %vm1331, %v1322, %v1338
    %v1340 = vsel %vm1330, %v1337, %v1339
    %v1341 = vsel %vm1329, %v1319, %v1322
    %v1342 = vsel %vm1332, %v1328, 1326507024
    %v1343 = vsel %vm1331, %v1325, %v1342
    %v1344 = vsel %vm1330, %v1341, %v1343
    %v1345 = vshll.u32 %v1305, 8
    %v1346 = vmul.u32.u64.compose %v1345, %v1344
    %v1347 = vextract.low.u32 %v1346
    %v1348 = vextract.high.u32 %v1346
    %v1349 = vmul.u32.u64.compose %v1345, %v1340
    %v1350 = vextract.low.u32 %v1349
    %v1351 = vextract.high.u32 %v1349
    %v1352 = vmul.u32 %v1345, %v1336
    %v1353 = vadd.s32 %v1348, %v1350
    %vm1354 = vc.u32 %v1348, %v1350
    %v1355 = vadd.s32 %v1351, 1
    %v1356 = vsel %vm1354, %v1355, %v1351
    %v1357 = vadd.s32 %v1352, %v1356
    %v1358 = vadd.s32 %v1357, 536870912
    %v1359 = vshrl.u32 %v1358, 30
    %v1360 = vshll.u32 %v1359, 30
    %v1361 = vsub.s32 %v1357, %v1360
    %vm1362 = vcmp.lt.s32.totalorder %v1361, 0
    %v1363 = vsub.s32 0, %v1361
    %v1364 = vsel %vm1362, %v1363, %v1361
    %v1365 = vclz %v1364
    %v1366 = vsub.s32 %v1365, 2
    %vm1367 = vcmp.gt.s32.totalorder 0, %v1366
    %v1368 = vsel %vm1367, 0, %v1366
    %v1369 = vsub.s32 32, %v1368
    %v1370 = vshll.u32 %v1361, %v1368
    %v1371 = vshrl.u32 %v1353, %v1369
    %v1372 = vor.u32 %v1370, %v1371
    %v1373 = vsub.s32 4294967266, %v1368
    %v1374 = vadd.s32 %v1373, 127
    %v1375 = vshll.u32 %v1374, 23
    %v1376 = vor.u32 4788187, %v1375
    %v1377 = vand.u32 2147483647, %v1376
    %v1379 = vcvt.s32.f32 %v1372
    %v1380 = vmul.f32 %v1379, %v1377
    %v1381 = vxor.u32 %v1380, 2147483648
    %v1382 = vsel %vm1299, %v1381, %v1380
    %v1383 = vsub.s32 4, %v1359
    %v1384 = vsel %vm1299, %v1383, %v1359
    %v1385 = vsel %vm1298, %v1180, %v1382
    %v1386 = vsel %vm1298, 0, %v1384
    %v1387 = vcosq.f32.pop %v1385
    %v1388 = vsinq.f32.pop %v1385
    %vm1389 = vweird.f32 %v1180
    %v1390 = vadd.s32 %v1386, 3
    %v1391 = vand.u32 %v1390, 3
    %vm1392 = vcmp.lt.s32.totalorder %v1391, 2
    %vm1393 = vcmp.eq.s32.totalorder %v1391, 0
    %v1394 = vxor.u32 %v1388, 2147483648
    %v1395 = vsel %vm1393, %v1387, %v1394
    %vm1396 = vcmp.eq.s32.totalorder %v1391, 2
    %v1397 = vxor.u32 %v1387, 2147483648
    %v1398 = vsel %vm1396, %v1397, %v1388
    %v1399 = vsel %vm1392, %v1395, %v1398
    %v1400 = vsel %vm1389, nan, %v1399
    %v1401 = vand.u32 2147483647, %v1185
    %vm1402 = vcmp.le.f32.partialorder %v1401, 0.7853982
    %vm1403 = vcmp.lt.s32.totalorder %v1185, 0
    %v1404 = vand.u32 %v1185, 2139095040
    %v1405 = vshrl.u32 %v1404, 23
    %v1406 = vsub.s32 %v1405, 127
    %v1407 = vand.u32 2147483647, %v1185
    %v1408 = vand.u32 %v1407, 8388607
    %v1409 = vor.u32 %v1408, 8388608
    %v1410 = vsub.s32 0, %v1409
    %v1411 = vadd.s32 %v1406, 1
    %vm1412 = vcmp.gt.s32.totalorder %v1411, 0
    %v1413 = vsel %vm1412, %v1411, 0
    %v1414 = vshrl.u32 %v1413, 5
    %v1415 = vand.u32 %v1413, 31
    %v1416 = vsub.s32 32, %v1415
    %v1417 = vshrl.u32 683565275, %v1416
    %v1418 = vshll.u32 683565275, %v1415
    %v1419 = vshrl.u32 2475754826, %v1416
    %v1420 = vor.u32 %v1418, %v1419
    %v1421 = vshll.u32 2475754826, %v1415
    %v1422 = vshrl.u32 2131351028, %v1416
    %v1423 = vor.u32 %v1421, %v1422
    %v1424 = vshll.u32 2131351028, %v1415
    %v1425 = vshrl.u32 2102212464, %v1416
    %v1426 = vor.u32 %v1424, %v1425
    %v1427 = vshll.u32 2102212464, %v1415
    %v1428 = vshrl.u32 920167782, %v1416
    %v1429 = vor.u32 %v1427, %v1428
    %v1430 = vshll.u32 920167782, %v1415
    %v1431 = vshrl.u32 1326507024, %v1416
    %v1432 = vor.u32 %v1430, %v1431
    %vm1433 = vcmp.lt.s32.totalorder %v1414, 1
    %vm1434 = vcmp.lt.s32.totalorder %v1414, 2
    %vm1435 = vcmp.lt.s32.totalorder %v1414, 3
    %vm1436 = vcmp.lt.s32.totalorder %v1414, 4
    %v1437 = vsel %vm1433, %v1417, %v1420
    %v1438 = vsel %vm1436, %v1426, 2102212464
    %v1439 = vsel %vm1435, %v1423, %v1438
    %v1440 = vsel %vm1434, %v1437, %v1439
    %v1441 = vsel %vm1433, %v1420, %v1423
    %v1442 = vsel %vm1436, %v1429, 920167782
    %v1443 = vsel %vm1435, %v1426, %v1442
    %v1444 = vsel %vm1434, %v1441, %v1443
    %v1445 = vsel %vm1433, %v1423, %v1426
    %v1446 = vsel %vm1436, %v1432, 1326507024
    %v1447 = vsel %vm1435, %v1429, %v1446
    %v1448 = vsel %vm1434, %v1445, %v1447
    %v1449 = vshll.u32 %v1409, 8
    %v1450 = vmul.u32.u64.compose %v1449, %v1448
    %v1451 = vextract.low.u32 %v1450
    %v1452 = vextract.high.u32 %v1450
    %v1453 = vmul.u32.u64.compose %v1449, %v1444
    %v1454 = vextract.low.u32 %v1453
    %v1455 = vextract.high.u32 %v1453
    %v1456 = vmul.u32 %v1449, %v1440
    %v1457 = vadd.s32 %v1452, %v1454
    %vm1458 = vc.u32 %v1452, %v1454
    %v1459 = vadd.s32 %v1455, 1
    %v1460 = vsel %vm1458, %v1459, %v1455
    %v1461 = vadd.s32 %v1456, %v1460
    %v1462 = vadd.s32 %v1461, 536870912
    %v1463 = vshrl.u32 %v1462, 30
    %v1464 = vshll.u32 %v1463, 30
    %v1465 = vsub.s32 %v1461, %v1464
    %vm1466 = vcmp.lt.s32.totalorder %v1465, 0
    %v1467 = vsub.s32 0, %v1465
    %v1468 = vsel %vm1466, %v1467, %v1465
    %v1469 = vclz %v1468
    %v1470 = vsub.s32 %v1469, 2
    %vm1471 = vcmp.gt.s32.totalorder 0, %v1470
    %v1472 = vsel %vm1471, 0, %v1470
    %v1473 = vsub.s32 32, %v1472
    %v1474 = vshll.u32 %v1465, %v1472
    %v1475 = vshrl.u32 %v1457, %v1473
    %v1476 = vor.u32 %v1474, %v1475
    %v1477 = vsub.s32 4294967266, %v1472
    %v1478 = vadd.s32 %v1477, 127
    %v1479 = vshll.u32 %v1478, 23
    %v1480 = vor.u32 4788187, %v1479
    %v1481 = vand.u32 2147483647, %v1480
    %v1483 = vcvt.s32.f32 %v1476
    %v1484 = vmul.f32 %v1483, %v1481
    %v1485 = vxor.u32 %v1484, 2147483648
    %v1486 = vsel %vm1403, %v1485, %v1484
    %v1487 = vsub.s32 4, %v1463
    %v1488 = vsel %vm1403, %v1487, %v1463
    %v1489 = vsel %vm1402, %v1185, %v1486
    %v1490 = vsel %vm1402, 0, %v1488
    %v1491 = vcosq.f32.pop %v1489
    %v1492 = vsinq.f32.pop %v1489
    %vm1493 = vweird.f32 %v1185
    %v1494 = vadd.s32 %v1490, 3
    %v1495 = vand.u32 %v1494, 3
    %vm1496 = vcmp.lt.s32.totalorder %v1495, 2
    %vm1497 = vcmp.eq.s32.totalorder %v1495, 0
    %v1498 = vxor.u32 %v1492, 2147483648
    %v1499 = vsel %vm1497, %v1491, %v1498
    %vm1500 = vcmp.eq.s32.totalorder %v1495, 2
    %v1501 = vxor.u32 %v1491, 2147483648
    %v1502 = vsel %vm1500, %v1501, %v1492
    %v1503 = vsel %vm1496, %v1499, %v1502
    %v1504 = vsel %vm1493, nan, %v1503
    %v1505 = vand.u32 2147483647, %v1190
    %vm1506 = vcmp.le.f32.partialorder %v1505, 0.7853982
    %vm1507 = vcmp.lt.s32.totalorder %v1190, 0
    %v1508 = vand.u32 %v1190, 2139095040
    %v1509 = vshrl.u32 %v1508, 23
    %v1510 = vsub.s32 %v1509, 127
    %v1511 = vand.u32 2147483647, %v1190
    %v1512 = vand.u32 %v1511, 8388607
    %v1513 = vor.u32 %v1512, 8388608
    %v1514 = vsub.s32 0, %v1513
    %v1515 = vadd.s32 %v1510, 1
    %vm1516 = vcmp.gt.s32.totalorder %v1515, 0
    %v1517 = vsel %vm1516, %v1515, 0
    %v1518 = vshrl.u32 %v1517, 5
    %v1519 = vand.u32 %v1517, 31
    %v1520 = vsub.s32 32, %v1519
    %v1521 = vshrl.u32 683565275, %v1520
    %v1522 = vshll.u32 683565275, %v1519
    %v1523 = vshrl.u32 2475754826, %v1520
    %v1524 = vor.u32 %v1522, %v1523
    %v1525 = vshll.u32 2475754826, %v1519
    %v1526 = vshrl.u32 2131351028, %v1520
    %v1527 = vor.u32 %v1525, %v1526
    %v1528 = vshll.u32 2131351028, %v1519
    %v1529 = vshrl.u32 2102212464, %v1520
    %v1530 = vor.u32 %v1528, %v1529
    %v1531 = vshll.u32 2102212464, %v1519
    %v1532 = vshrl.u32 920167782, %v1520
    %v1533 = vor.u32 %v1531, %v1532
    %v1534 = vshll.u32 920167782, %v1519
    %v1535 = vshrl.u32 1326507024, %v1520
    %v1536 = vor.u32 %v1534, %v1535
    %vm1537 = vcmp.lt.s32.totalorder %v1518, 1
    %vm1538 = vcmp.lt.s32.totalorder %v1518, 2
    %vm1539 = vcmp.lt.s32.totalorder %v1518, 3
    %vm1540 = vcmp.lt.s32.totalorder %v1518, 4
    %v1541 = vsel %vm1537, %v1521, %v1524
    %v1542 = vsel %vm1540, %v1530, 2102212464
    %v1543 = vsel %vm1539, %v1527, %v1542
    %v1544 = vsel %vm1538, %v1541, %v1543
    %v1545 = vsel %vm1537, %v1524, %v1527
    %v1546 = vsel %vm1540, %v1533, 920167782
    %v1547 = vsel %vm1539, %v1530, %v1546
    %v1548 = vsel %vm1538, %v1545, %v1547
    %v1549 = vsel %vm1537, %v1527, %v1530
    %v1550 = vsel %vm1540, %v1536, 1326507024
    %v1551 = vsel %vm1539, %v1533, %v1550
    %v1552 = vsel %vm1538, %v1549, %v1551
    %v1553 = vshll.u32 %v1513, 8
    %v1554 = vmul.u32.u64.compose %v1553, %v1552
    %v1555 = vextract.low.u32 %v1554
    %v1556 = vextract.high.u32 %v1554
    %v1557 = vmul.u32.u64.compose %v1553, %v1548
    %v1558 = vextract.low.u32 %v1557
    %v1559 = vextract.high.u32 %v1557
    %v1560 = vmul.u32 %v1553, %v1544
    %v1561 = vadd.s32 %v1556, %v1558
    %vm1562 = vc.u32 %v1556, %v1558
    %v1563 = vadd.s32 %v1559, 1
    %v1564 = vsel %vm1562, %v1563, %v1559
    %v1565 = vadd.s32 %v1560, %v1564
    %v1566 = vadd.s32 %v1565, 536870912
    %v1567 = vshrl.u32 %v1566, 30
    %v1568 = vshll.u32 %v1567, 30
    %v1569 = vsub.s32 %v1565, %v1568
    %vm1570 = vcmp.lt.s32.totalorder %v1569, 0
    %v1571 = vsub.s32 0, %v1569
    %v1572 = vsel %vm1570, %v1571, %v1569
    %v1573 = vclz %v1572
    %v1574 = vsub.s32 %v1573, 2
    %vm1575 = vcmp.gt.s32.totalorder 0, %v1574
    %v1576 = vsel %vm1575, 0, %v1574
    %v1577 = vsub.s32 32, %v1576
    %v1578 = vshll.u32 %v1569, %v1576
    %v1579 = vshrl.u32 %v1561, %v1577
    %v1580 = vor.u32 %v1578, %v1579
    %v1581 = vsub.s32 4294967266, %v1576
    %v1582 = vadd.s32 %v1581, 127
    %v1583 = vshll.u32 %v1582, 23
    %v1584 = vor.u32 4788187, %v1583
    %v1585 = vand.u32 2147483647, %v1584
    %v1587 = vcvt.s32.f32 %v1580
    %v1588 = vmul.f32 %v1587, %v1585
    %v1589 = vxor.u32 %v1588, 2147483648
    %v1590 = vsel %vm1507, %v1589, %v1588
    %v1591 = vsub.s32 4, %v1567
    %v1592 = vsel %vm1507, %v1591, %v1567
    %v1593 = vsel %vm1506, %v1190, %v1590
    %v1594 = vsel %vm1506, 0, %v1592
    %v1595 = vcosq.f32.pop %v1593
    %v1596 = vsinq.f32.pop %v1593
    %vm1597 = vweird.f32 %v1190
    %v1598 = vadd.s32 %v1594, 3
    %v1599 = vand.u32 %v1598, 3
    %vm1600 = vcmp.lt.s32.totalorder %v1599, 2
    %vm1601 = vcmp.eq.s32.totalorder %v1599, 0
    %v1602 = vxor.u32 %v1596, 2147483648
    %v1603 = vsel %vm1601, %v1595, %v1602
    %vm1604 = vcmp.eq.s32.totalorder %v1599, 2
    %v1605 = vxor.u32 %v1595, 2147483648
    %v1606 = vsel %vm1604, %v1605, %v1596
    %v1607 = vsel %vm1600, %v1603, %v1606
    %v1608 = vsel %vm1597, nan, %v1607
    %v1609 = vld [vmem:[%s7] sm:$0xff]
    %v1610 = vld [vmem:[%s7 + $0x8] sm:$0xff]
    %v1611 = vld [vmem:[%s7 + $0x10] sm:$0xff]
    %v1612 = vld [vmem:[%s7 + $0x18] sm:$0xff]
    %v1613 = vld [vmem:[%s8] sm:$0xff]
    %v1614 = vld [vmem:[%s8 + $0x8] sm:$0xff]
    %v1615 = vld [vmem:[%s8 + $0x10] sm:$0xff]
    %v1616 = vld [vmem:[%s8 + $0x18] sm:$0xff]
    %1618 = vset.pattern.permute.xlu0 0
    %1619 = vperm.xlu0 %1618, %v1613
    %v1620 = vpop.permute.xlu0 %1619
    %1623 = vset.pattern.permute.xlu0 0
    %1624 = vperm.xlu0 %1623, %v1614
    %v1625 = vpop.permute.xlu0 %1624
    %1628 = vset.pattern.permute.xlu0 0
    %1629 = vperm.xlu0 %1628, %v1615
    %v1630 = vpop.permute.xlu0 %1629
    %1633 = vset.pattern.permute.xlu0 0
    %1634 = vperm.xlu0 %1633, %v1616
    %v1635 = vpop.permute.xlu0 %1634
    %v1638 = vsel %vm554, %v1609, 0
    %v1641 = vsel %vm554, %v1610, 0
    %v1644 = vsel %vm554, %v1611, 0
    %v1647 = vsel %vm554, %v1612, 0
    %1649 = vmatprep.subr.mxu0 0.0
    %1650 = vmatpush1.msra.mxu0 %v1296
    %1651 = vmatprep.subr.mxu0 0.0
    %1652 = vmatpush1.msra.mxu0 %v1400
    %1653 = vmatprep.subr.mxu0 0.0
    %1654 = vmatpush1.msra.mxu0 %v1504
    %1655 = vmatprep.subr.mxu0 0.0
    %1656 = vmatpush1.msra.mxu0 %v1608
    %1657 = vmatprep.subr.mxu0 0.0
    %1658 = vmatpush1.msra.mxu0 0.0
    %1659 = vmatprep.subr.mxu0 0.0
    %1660 = vmatpush1.msra.mxu0 0.0
    %1661 = vmatprep.subr.mxu0 0.0
    %1662 = vmatpush1.msra.mxu0 0.0
    %1663 = vmatprep.subr.mxu0 0.0
    %1664 = vmatpush1.msra.mxu0 0.0
    %1665 = vmatprep.subr.mxu0 0.0
    %1666 = vmatpush1.msra.mxu0 0.0
    %1667 = vmatprep.subr.mxu0 0.0
    %1668 = vmatpush1.msra.mxu0 0.0
    %1669 = vmatprep.subr.mxu0 0.0
    %1670 = vmatpush1.msra.mxu0 0.0
    %1671 = vmatprep.subr.mxu0 0.0
    %1672 = vmatpush1.msra.mxu0 0.0
    %1673 = vmatprep.subr.mxu0 0.0
    %1674 = vmatpush1.msra.mxu0 0.0
    %1675 = vmatprep.subr.mxu0 0.0
    %1676 = vmatpush1.msra.mxu0 0.0
    %1677 = vmatprep.subr.mxu0 0.0
    %1678 = vmatpush1.msra.mxu0 0.0
    %1679 = vmatprep.subr.mxu0 0.0
    %1680 = vmatpush1.msra.mxu0 0.0
    %1681 = vmatprep.subr.mxu0 0.0
    %1682 = vmatpush1.msra.mxu0 0.0
    %1683 = vmatprep.subr.mxu0 0.0
    %1684 = vmatpush1.msra.mxu0 0.0
    %1685 = vmatprep.subr.mxu0 0.0
    %1686 = vmatpush1.msra.mxu0 0.0
    %1687 = vmatprep.subr.mxu0 0.0
    %1688 = vmatpush1.msra.mxu0 0.0
    %1689 = vmatprep.subr.mxu0 0.0
    %1690 = vmatpush1.msra.mxu0 0.0
    %1691 = vmatprep.subr.mxu0 0.0
    %1692 = vmatpush1.msra.mxu0 0.0
    %1693 = vmatprep.subr.mxu0 0.0
    %1694 = vmatpush1.msra.mxu0 0.0
    %1695 = vmatprep.subr.mxu0 0.0
    %1696 = vmatpush1.msra.mxu0 0.0
    %1697 = vmatprep.subr.mxu0 0.0
    %1698 = vmatpush1.msra.mxu0 0.0
    %1699 = vmatprep.subr.mxu0 0.0
    %1700 = vmatpush1.msra.mxu0 0.0
    %1701 = vmatprep.subr.mxu0 0.0
    %1702 = vmatpush1.msra.mxu0 0.0
    %1703 = vmatprep.subr.mxu0 0.0
    %1704 = vmatpush1.msra.mxu0 0.0
    %1705 = vmatprep.subr.mxu0 0.0
    %1706 = vmatpush1.msra.mxu0 0.0
    %1707 = vmatprep.subr.mxu0 0.0
    %1708 = vmatpush1.msra.mxu0 0.0
    %1709 = vmatprep.subr.mxu0 0.0
    %1710 = vmatpush1.msra.mxu0 0.0
    %1711 = vmatprep.subr.mxu0 0.0
    %1712 = vmatpush1.msra.mxu0 0.0
    %1713 = vmatprep.mubr.f32.mxu0 0.0
    %1714 = vmatmul.mubr.f32.gmra.mrb[0].mxu0 %v1638
    %v1715 = vpop.f32.mrb[0].mxu0
    %v1716 = vadd.f32 %v1620, %v1715
    %v1717 = vpop.f32.mrb[0].mxu0
    %1718 = vmatprep.mubr.f32.mxu0 0.0
    %1719 = vmatmul.mubr.f32.gmra.mrb[0].mxu0 %v1641
    %v1720 = vpop.f32.mrb[0].mxu0
    %v1721 = vadd.f32 %v1625, %v1720
    %v1722 = vpop.f32.mrb[0].mxu0
    %1723 = vmatprep.mubr.f32.mxu0 0.0
    %1724 = vmatmul.mubr.f32.gmra.mrb[0].mxu0 %v1644
    %v1725 = vpop.f32.mrb[0].mxu0
    %v1726 = vadd.f32 %v1630, %v1725
    %v1727 = vpop.f32.mrb[0].mxu0
    %1728 = vmatprep.mubr.f32.mxu0 0.0
    %1729 = vmatmul.mubr.f32.gmra.mrb[0].mxu0 %v1647
    %v1730 = vpop.f32.mrb[0].mxu0
    %v1731 = vadd.f32 %v1635, %v1730
    %v1732 = vpop.f32.mrb[0].mxu0
    %1733 = vdwg.mxu0
    %v1734 = vand.u32 2147483647, %v1716
    %vm1735 = vcmp.le.f32.partialorder %v1734, 0.7853982
    %vm1736 = vcmp.lt.s32.totalorder %v1716, 0
    %v1737 = vand.u32 %v1716, 2139095040
    %v1738 = vshrl.u32 %v1737, 23
    %v1739 = vsub.s32 %v1738, 127
    %v1740 = vand.u32 2147483647, %v1716
    %v1741 = vand.u32 %v1740, 8388607
    %v1742 = vor.u32 %v1741, 8388608
    %v1743 = vsub.s32 0, %v1742
    %v1744 = vadd.s32 %v1739, 1
    %vm1745 = vcmp.gt.s32.totalorder %v1744, 0
    %v1746 = vsel %vm1745, %v1744, 0
    %v1747 = vshrl.u32 %v1746, 5
    %v1748 = vand.u32 %v1746, 31
    %v1749 = vsub.s32 32, %v1748
    %v1750 = vshrl.u32 683565275, %v1749
    %v1751 = vshll.u32 683565275, %v1748
    %v1752 = vshrl.u32 2475754826, %v1749
    %v1753 = vor.u32 %v1751, %v1752
    %v1754 = vshll.u32 2475754826, %v1748
    %v1755 = vshrl.u32 2131351028, %v1749
    %v1756 = vor.u32 %v1754, %v1755
    %v1757 = vshll.u32 2131351028, %v1748
    %v1758 = vshrl.u32 2102212464, %v1749
    %v1759 = vor.u32 %v1757, %v1758
    %v1760 = vshll.u32 2102212464, %v1748
    %v1761 = vshrl.u32 920167782, %v1749
    %v1762 = vor.u32 %v1760, %v1761
    %v1763 = vshll.u32 920167782, %v1748
    %v1764 = vshrl.u32 1326507024, %v1749
    %v1765 = vor.u32 %v1763, %v1764
    %vm1766 = vcmp.lt.s32.totalorder %v1747, 1
    %vm1767 = vcmp.lt.s32.totalorder %v1747, 2
    %vm1768 = vcmp.lt.s32.totalorder %v1747, 3
    %vm1769 = vcmp.lt.s32.totalorder %v1747, 4
    %v1770 = vsel %vm1766, %v1750, %v1753
    %v1771 = vsel %vm1769, %v1759, 2102212464
    %v1772 = vsel %vm1768, %v1756, %v1771
    %v1773 = vsel %vm1767, %v1770, %v1772
    %v1774 = vsel %vm1766, %v1753, %v1756
    %v1775 = vsel %vm1769, %v1762, 920167782
    %v1776 = vsel %vm1768, %v1759, %v1775
    %v1777 = vsel %vm1767, %v1774, %v1776
    %v1778 = vsel %vm1766, %v1756, %v1759
    %v1779 = vsel %vm1769, %v1765, 1326507024
    %v1780 = vsel %vm1768, %v1762, %v1779
    %v1781 = vsel %vm1767, %v1778, %v1780
    %v1782 = vshll.u32 %v1742, 8
    %v1783 = vmul.u32.u64.compose %v1782, %v1781
    %v1784 = vextract.low.u32 %v1783
    %v1785 = vextract.high.u32 %v1783
    %v1786 = vmul.u32.u64.compose %v1782, %v1777
    %v1787 = vextract.low.u32 %v1786
    %v1788 = vextract.high.u32 %v1786
    %v1789 = vmul.u32 %v1782, %v1773
    %v1790 = vadd.s32 %v1785, %v1787
    %vm1791 = vc.u32 %v1785, %v1787
    %v1792 = vadd.s32 %v1788, 1
    %v1793 = vsel %vm1791, %v1792, %v1788
    %v1794 = vadd.s32 %v1789, %v1793
    %v1795 = vadd.s32 %v1794, 536870912
    %v1796 = vshrl.u32 %v1795, 30
    %v1797 = vshll.u32 %v1796, 30
    %v1798 = vsub.s32 %v1794, %v1797
    %vm1799 = vcmp.lt.s32.totalorder %v1798, 0
    %v1800 = vsub.s32 0, %v1798
    %v1801 = vsel %vm1799, %v1800, %v1798
    %v1802 = vclz %v1801
    %v1803 = vsub.s32 %v1802, 2
    %vm1804 = vcmp.gt.s32.totalorder 0, %v1803
    %v1805 = vsel %vm1804, 0, %v1803
    %v1806 = vsub.s32 32, %v1805
    %v1807 = vshll.u32 %v1798, %v1805
    %v1808 = vshrl.u32 %v1790, %v1806
    %v1809 = vor.u32 %v1807, %v1808
    %v1810 = vsub.s32 4294967266, %v1805
    %v1811 = vadd.s32 %v1810, 127
    %v1812 = vshll.u32 %v1811, 23
    %v1813 = vor.u32 4788187, %v1812
    %v1814 = vand.u32 2147483647, %v1813
    %v1816 = vcvt.s32.f32 %v1809
    %v1817 = vmul.f32 %v1816, %v1814
    %v1818 = vxor.u32 %v1817, 2147483648
    %v1819 = vsel %vm1736, %v1818, %v1817
    %v1820 = vsub.s32 4, %v1796
    %v1821 = vsel %vm1736, %v1820, %v1796
    %v1822 = vsel %vm1735, %v1716, %v1819
    %v1823 = vsel %vm1735, 0, %v1821
    %v1824 = vcosq.f32.pop %v1822
    %v1825 = vsinq.f32.pop %v1822
    %vm1826 = vweird.f32 %v1716
    %v1827 = vadd.s32 %v1823, 3
    %v1828 = vand.u32 %v1827, 3
    %vm1829 = vcmp.lt.s32.totalorder %v1828, 2
    %vm1830 = vcmp.eq.s32.totalorder %v1828, 0
    %v1831 = vxor.u32 %v1825, 2147483648
    %v1832 = vsel %vm1830, %v1824, %v1831
    %vm1833 = vcmp.eq.s32.totalorder %v1828, 2
    %v1834 = vxor.u32 %v1824, 2147483648
    %v1835 = vsel %vm1833, %v1834, %v1825
    %v1836 = vsel %vm1829, %v1832, %v1835
    %v1837 = vsel %vm1826, nan, %v1836
    %v1838 = vand.u32 2147483647, %v1721
    %vm1839 = vcmp.le.f32.partialorder %v1838, 0.7853982
    %vm1840 = vcmp.lt.s32.totalorder %v1721, 0
    %v1841 = vand.u32 %v1721, 2139095040
    %v1842 = vshrl.u32 %v1841, 23
    %v1843 = vsub.s32 %v1842, 127
    %v1844 = vand.u32 2147483647, %v1721
    %v1845 = vand.u32 %v1844, 8388607
    %v1846 = vor.u32 %v1845, 8388608
    %v1847 = vsub.s32 0, %v1846
    %v1848 = vadd.s32 %v1843, 1
    %vm1849 = vcmp.gt.s32.totalorder %v1848, 0
    %v1850 = vsel %vm1849, %v1848, 0
    %v1851 = vshrl.u32 %v1850, 5
    %v1852 = vand.u32 %v1850, 31
    %v1853 = vsub.s32 32, %v1852
    %v1854 = vshrl.u32 683565275, %v1853
    %v1855 = vshll.u32 683565275, %v1852
    %v1856 = vshrl.u32 2475754826, %v1853
    %v1857 = vor.u32 %v1855, %v1856
    %v1858 = vshll.u32 2475754826, %v1852
    %v1859 = vshrl.u32 2131351028, %v1853
    %v1860 = vor.u32 %v1858, %v1859
    %v1861 = vshll.u32 2131351028, %v1852
    %v1862 = vshrl.u32 2102212464, %v1853
    %v1863 = vor.u32 %v1861, %v1862
    %v1864 = vshll.u32 2102212464, %v1852
    %v1865 = vshrl.u32 920167782, %v1853
    %v1866 = vor.u32 %v1864, %v1865
    %v1867 = vshll.u32 920167782, %v1852
    %v1868 = vshrl.u32 1326507024, %v1853
    %v1869 = vor.u32 %v1867, %v1868
    %vm1870 = vcmp.lt.s32.totalorder %v1851, 1
    %vm1871 = vcmp.lt.s32.totalorder %v1851, 2
    %vm1872 = vcmp.lt.s32.totalorder %v1851, 3
    %vm1873 = vcmp.lt.s32.totalorder %v1851, 4
    %v1874 = vsel %vm1870, %v1854, %v1857
    %v1875 = vsel %vm1873, %v1863, 2102212464
    %v1876 = vsel %vm1872, %v1860, %v1875
    %v1877 = vsel %vm1871, %v1874, %v1876
    %v1878 = vsel %vm1870, %v1857, %v1860
    %v1879 = vsel %vm1873, %v1866, 920167782
    %v1880 = vsel %vm1872, %v1863, %v1879
    %v1881 = vsel %vm1871, %v1878, %v1880
    %v1882 = vsel %vm1870, %v1860, %v1863
    %v1883 = vsel %vm1873, %v1869, 1326507024
    %v1884 = vsel %vm1872, %v1866, %v1883
    %v1885 = vsel %vm1871, %v1882, %v1884
    %v1886 = vshll.u32 %v1846, 8
    %v1887 = vmul.u32.u64.compose %v1886, %v1885
    %v1888 = vextract.low.u32 %v1887
    %v1889 = vextract.high.u32 %v1887
    %v1890 = vmul.u32.u64.compose %v1886, %v1881
    %v1891 = vextract.low.u32 %v1890
    %v1892 = vextract.high.u32 %v1890
    %v1893 = vmul.u32 %v1886, %v1877
    %v1894 = vadd.s32 %v1889, %v1891
    %vm1895 = vc.u32 %v1889, %v1891
    %v1896 = vadd.s32 %v1892, 1
    %v1897 = vsel %vm1895, %v1896, %v1892
    %v1898 = vadd.s32 %v1893, %v1897
    %v1899 = vadd.s32 %v1898, 536870912
    %v1900 = vshrl.u32 %v1899, 30
    %v1901 = vshll.u32 %v1900, 30
    %v1902 = vsub.s32 %v1898, %v1901
    %vm1903 = vcmp.lt.s32.totalorder %v1902, 0
    %v1904 = vsub.s32 0, %v1902
    %v1905 = vsel %vm1903, %v1904, %v1902
    %v1906 = vclz %v1905
    %v1907 = vsub.s32 %v1906, 2
    %vm1908 = vcmp.gt.s32.totalorder 0, %v1907
    %v1909 = vsel %vm1908, 0, %v1907
    %v1910 = vsub.s32 32, %v1909
    %v1911 = vshll.u32 %v1902, %v1909
    %v1912 = vshrl.u32 %v1894, %v1910
    %v1913 = vor.u32 %v1911, %v1912
    %v1914 = vsub.s32 4294967266, %v1909
    %v1915 = vadd.s32 %v1914, 127
    %v1916 = vshll.u32 %v1915, 23
    %v1917 = vor.u32 4788187, %v1916
    %v1918 = vand.u32 2147483647, %v1917
    %v1920 = vcvt.s32.f32 %v1913
    %v1921 = vmul.f32 %v1920, %v1918
    %v1922 = vxor.u32 %v1921, 2147483648
    %v1923 = vsel %vm1840, %v1922, %v1921
    %v1924 = vsub.s32 4, %v1900
    %v1925 = vsel %vm1840, %v1924, %v1900
    %v1926 = vsel %vm1839, %v1721, %v1923
    %v1927 = vsel %vm1839, 0, %v1925
    %v1928 = vcosq.f32.pop %v1926
    %v1929 = vsinq.f32.pop %v1926
    %vm1930 = vweird.f32 %v1721
    %v1931 = vadd.s32 %v1927, 3
    %v1932 = vand.u32 %v1931, 3
    %vm1933 = vcmp.lt.s32.totalorder %v1932, 2
    %vm1934 = vcmp.eq.s32.totalorder %v1932, 0
    %v1935 = vxor.u32 %v1929, 2147483648
    %v1936 = vsel %vm1934, %v1928, %v1935
    %vm1937 = vcmp.eq.s32.totalorder %v1932, 2
    %v1938 = vxor.u32 %v1928, 2147483648
    %v1939 = vsel %vm1937, %v1938, %v1929
    %v1940 = vsel %vm1933, %v1936, %v1939
    %v1941 = vsel %vm1930, nan, %v1940
    %v1942 = vand.u32 2147483647, %v1726
    %vm1943 = vcmp.le.f32.partialorder %v1942, 0.7853982
    %vm1944 = vcmp.lt.s32.totalorder %v1726, 0
    %v1945 = vand.u32 %v1726, 2139095040
    %v1946 = vshrl.u32 %v1945, 23
    %v1947 = vsub.s32 %v1946, 127
    %v1948 = vand.u32 2147483647, %v1726
    %v1949 = vand.u32 %v1948, 8388607
    %v1950 = vor.u32 %v1949, 8388608
    %v1951 = vsub.s32 0, %v1950
    %v1952 = vadd.s32 %v1947, 1
    %vm1953 = vcmp.gt.s32.totalorder %v1952, 0
    %v1954 = vsel %vm1953, %v1952, 0
    %v1955 = vshrl.u32 %v1954, 5
    %v1956 = vand.u32 %v1954, 31
    %v1957 = vsub.s32 32, %v1956
    %v1958 = vshrl.u32 683565275, %v1957
    %v1959 = vshll.u32 683565275, %v1956
    %v1960 = vshrl.u32 2475754826, %v1957
    %v1961 = vor.u32 %v1959, %v1960
    %v1962 = vshll.u32 2475754826, %v1956
    %v1963 = vshrl.u32 2131351028, %v1957
    %v1964 = vor.u32 %v1962, %v1963
    %v1965 = vshll.u32 2131351028, %v1956
    %v1966 = vshrl.u32 2102212464, %v1957
    %v1967 = vor.u32 %v1965, %v1966
    %v1968 = vshll.u32 2102212464, %v1956
    %v1969 = vshrl.u32 920167782, %v1957
    %v1970 = vor.u32 %v1968, %v1969
    %v1971 = vshll.u32 920167782, %v1956
    %v1972 = vshrl.u32 1326507024, %v1957
    %v1973 = vor.u32 %v1971, %v1972
    %vm1974 = vcmp.lt.s32.totalorder %v1955, 1
    %vm1975 = vcmp.lt.s32.totalorder %v1955, 2
    %vm1976 = vcmp.lt.s32.totalorder %v1955, 3
    %vm1977 = vcmp.lt.s32.totalorder %v1955, 4
    %v1978 = vsel %vm1974, %v1958, %v1961
    %v1979 = vsel %vm1977, %v1967, 2102212464
    %v1980 = vsel %vm1976, %v1964, %v1979
    %v1981 = vsel %vm1975, %v1978, %v1980
    %v1982 = vsel %vm1974, %v1961, %v1964
    %v1983 = vsel %vm1977, %v1970, 920167782
    %v1984 = vsel %vm1976, %v1967, %v1983
    %v1985 = vsel %vm1975, %v1982, %v1984
    %v1986 = vsel %vm1974, %v1964, %v1967
    %v1987 = vsel %vm1977, %v1973, 1326507024
    %v1988 = vsel %vm1976, %v1970, %v1987
    %v1989 = vsel %vm1975, %v1986, %v1988
    %v1990 = vshll.u32 %v1950, 8
    %v1991 = vmul.u32.u64.compose %v1990, %v1989
    %v1992 = vextract.low.u32 %v1991
    %v1993 = vextract.high.u32 %v1991
    %v1994 = vmul.u32.u64.compose %v1990, %v1985
    %v1995 = vextract.low.u32 %v1994
    %v1996 = vextract.high.u32 %v1994
    %v1997 = vmul.u32 %v1990, %v1981
    %v1998 = vadd.s32 %v1993, %v1995
    %vm1999 = vc.u32 %v1993, %v1995
    %v2000 = vadd.s32 %v1996, 1
    %v2001 = vsel %vm1999, %v2000, %v1996
    %v2002 = vadd.s32 %v1997, %v2001
    %v2003 = vadd.s32 %v2002, 536870912
    %v2004 = vshrl.u32 %v2003, 30
    %v2005 = vshll.u32 %v2004, 30
    %v2006 = vsub.s32 %v2002, %v2005
    %vm2007 = vcmp.lt.s32.totalorder %v2006, 0
    %v2008 = vsub.s32 0, %v2006
    %v2009 = vsel %vm2007, %v2008, %v2006
    %v2010 = vclz %v2009
    %v2011 = vsub.s32 %v2010, 2
    %vm2012 = vcmp.gt.s32.totalorder 0, %v2011
    %v2013 = vsel %vm2012, 0, %v2011
    %v2014 = vsub.s32 32, %v2013
    %v2015 = vshll.u32 %v2006, %v2013
    %v2016 = vshrl.u32 %v1998, %v2014
    %v2017 = vor.u32 %v2015, %v2016
    %v2018 = vsub.s32 4294967266, %v2013
    %v2019 = vadd.s32 %v2018, 127
    %v2020 = vshll.u32 %v2019, 23
    %v2021 = vor.u32 4788187, %v2020
    %v2022 = vand.u32 2147483647, %v2021
    %v2024 = vcvt.s32.f32 %v2017
    %v2025 = vmul.f32 %v2024, %v2022
    %v2026 = vxor.u32 %v2025, 2147483648
    %v2027 = vsel %vm1944, %v2026, %v2025
    %v2028 = vsub.s32 4, %v2004
    %v2029 = vsel %vm1944, %v2028, %v2004
    %v2030 = vsel %vm1943, %v1726, %v2027
    %v2031 = vsel %vm1943, 0, %v2029
    %v2032 = vcosq.f32.pop %v2030
    %v2033 = vsinq.f32.pop %v2030
    %vm2034 = vweird.f32 %v1726
    %v2035 = vadd.s32 %v2031, 3
    %v2036 = vand.u32 %v2035, 3
    %vm2037 = vcmp.lt.s32.totalorder %v2036, 2
    %vm2038 = vcmp.eq.s32.totalorder %v2036, 0
    %v2039 = vxor.u32 %v2033, 2147483648
    %v2040 = vsel %vm2038, %v2032, %v2039
    %vm2041 = vcmp.eq.s32.totalorder %v2036, 2
    %v2042 = vxor.u32 %v2032, 2147483648
    %v2043 = vsel %vm2041, %v2042, %v2033
    %v2044 = vsel %vm2037, %v2040, %v2043
    %v2045 = vsel %vm2034, nan, %v2044
    %v2046 = vand.u32 2147483647, %v1731
    %vm2047 = vcmp.le.f32.partialorder %v2046, 0.7853982
    %vm2048 = vcmp.lt.s32.totalorder %v1731, 0
    %v2049 = vand.u32 %v1731, 2139095040
    %v2050 = vshrl.u32 %v2049, 23
    %v2051 = vsub.s32 %v2050, 127
    %v2052 = vand.u32 2147483647, %v1731
    %v2053 = vand.u32 %v2052, 8388607
    %v2054 = vor.u32 %v2053, 8388608
    %v2055 = vsub.s32 0, %v2054
    %v2056 = vadd.s32 %v2051, 1
    %vm2057 = vcmp.gt.s32.totalorder %v2056, 0
    %v2058 = vsel %vm2057, %v2056, 0
    %v2059 = vshrl.u32 %v2058, 5
    %v2060 = vand.u32 %v2058, 31
    %v2061 = vsub.s32 32, %v2060
    %v2062 = vshrl.u32 683565275, %v2061
    %v2063 = vshll.u32 683565275, %v2060
    %v2064 = vshrl.u32 2475754826, %v2061
    %v2065 = vor.u32 %v2063, %v2064
    %v2066 = vshll.u32 2475754826, %v2060
    %v2067 = vshrl.u32 2131351028, %v2061
    %v2068 = vor.u32 %v2066, %v2067
    %v2069 = vshll.u32 2131351028, %v2060
    %v2070 = vshrl.u32 2102212464, %v2061
    %v2071 = vor.u32 %v2069, %v2070
    %v2072 = vshll.u32 2102212464, %v2060
    %v2073 = vshrl.u32 920167782, %v2061
    %v2074 = vor.u32 %v2072, %v2073
    %v2075 = vshll.u32 920167782, %v2060
    %v2076 = vshrl.u32 1326507024, %v2061
    %v2077 = vor.u32 %v2075, %v2076
    %vm2078 = vcmp.lt.s32.totalorder %v2059, 1
    %vm2079 = vcmp.lt.s32.totalorder %v2059, 2
    %vm2080 = vcmp.lt.s32.totalorder %v2059, 3
    %vm2081 = vcmp.lt.s32.totalorder %v2059, 4
    %v2082 = vsel %vm2078, %v2062, %v2065
    %v2083 = vsel %vm2081, %v2071, 2102212464
    %v2084 = vsel %vm2080, %v2068, %v2083
    %v2085 = vsel %vm2079, %v2082, %v2084
    %v2086 = vsel %vm2078, %v2065, %v2068
    %v2087 = vsel %vm2081, %v2074, 920167782
    %v2088 = vsel %vm2080, %v2071, %v2087
    %v2089 = vsel %vm2079, %v2086, %v2088
    %v2090 = vsel %vm2078, %v2068, %v2071
    %v2091 = vsel %vm2081, %v2077, 1326507024
    %v2092 = vsel %vm2080, %v2074, %v2091
    %v2093 = vsel %vm2079, %v2090, %v2092
    %v2094 = vshll.u32 %v2054, 8
    %v2095 = vmul.u32.u64.compose %v2094, %v2093
    %v2096 = vextract.low.u32 %v2095
    %v2097 = vextract.high.u32 %v2095
    %v2098 = vmul.u32.u64.compose %v2094, %v2089
    %v2099 = vextract.low.u32 %v2098
    %v2100 = vextract.high.u32 %v2098
    %v2101 = vmul.u32 %v2094, %v2085
    %v2102 = vadd.s32 %v2097, %v2099
    %vm2103 = vc.u32 %v2097, %v2099
    %v2104 = vadd.s32 %v2100, 1
    %v2105 = vsel %vm2103, %v2104, %v2100
    %v2106 = vadd.s32 %v2101, %v2105
    %v2107 = vadd.s32 %v2106, 536870912
    %v2108 = vshrl.u32 %v2107, 30
    %v2109 = vshll.u32 %v2108, 30
    %v2110 = vsub.s32 %v2106, %v2109
    %vm2111 = vcmp.lt.s32.totalorder %v2110, 0
    %v2112 = vsub.s32 0, %v2110
    %v2113 = vsel %vm2111, %v2112, %v2110
    %v2114 = vclz %v2113
    %v2115 = vsub.s32 %v2114, 2
    %vm2116 = vcmp.gt.s32.totalorder 0, %v2115
    %v2117 = vsel %vm2116, 0, %v2115
    %v2118 = vsub.s32 32, %v2117
    %v2119 = vshll.u32 %v2110, %v2117
    %v2120 = vshrl.u32 %v2102, %v2118
    %v2121 = vor.u32 %v2119, %v2120
    %v2122 = vsub.s32 4294967266, %v2117
    %v2123 = vadd.s32 %v2122, 127
    %v2124 = vshll.u32 %v2123, 23
    %v2125 = vor.u32 4788187, %v2124
    %v2126 = vand.u32 2147483647, %v2125
    %v2128 = vcvt.s32.f32 %v2121
    %v2129 = vmul.f32 %v2128, %v2126
    %v2130 = vxor.u32 %v2129, 2147483648
    %v2131 = vsel %vm2048, %v2130, %v2129
    %v2132 = vsub.s32 4, %v2108
    %v2133 = vsel %vm2048, %v2132, %v2108
    %v2134 = vsel %vm2047, %v1731, %v2131
    %v2135 = vsel %vm2047, 0, %v2133
    %v2136 = vcosq.f32.pop %v2134
    %v2137 = vsinq.f32.pop %v2134
    %vm2138 = vweird.f32 %v1731
    %v2139 = vadd.s32 %v2135, 3
    %v2140 = vand.u32 %v2139, 3
    %vm2141 = vcmp.lt.s32.totalorder %v2140, 2
    %vm2142 = vcmp.eq.s32.totalorder %v2140, 0
    %v2143 = vxor.u32 %v2137, 2147483648
    %v2144 = vsel %vm2142, %v2136, %v2143
    %vm2145 = vcmp.eq.s32.totalorder %v2140, 2
    %v2146 = vxor.u32 %v2136, 2147483648
    %v2147 = vsel %vm2145, %v2146, %v2137
    %v2148 = vsel %vm2141, %v2144, %v2147
    %v2149 = vsel %vm2138, nan, %v2148
    %v2150 = vld [vmem:[%s9] sm:$0xff]
    %v2151 = vld [vmem:[%s9 + $0x8] sm:$0xff]
    %v2152 = vld [vmem:[%s9 + $0x10] sm:$0xff]
    %v2153 = vld [vmem:[%s9 + $0x18] sm:$0xff]
    %v2154 = vld [vmem:[%s10] sm:$0xff]
    %v2155 = vld [vmem:[%s10 + $0x8] sm:$0xff]
    %v2156 = vld [vmem:[%s10 + $0x10] sm:$0xff]
    %v2157 = vld [vmem:[%s10 + $0x18] sm:$0xff]
    %2159 = vset.pattern.permute.xlu0 0
    %2160 = vperm.xlu0 %2159, %v2154
    %v2161 = vpop.permute.xlu0 %2160
    %2164 = vset.pattern.permute.xlu0 0
    %2165 = vperm.xlu0 %2164, %v2155
    %v2166 = vpop.permute.xlu0 %2165
    %2169 = vset.pattern.permute.xlu0 0
    %2170 = vperm.xlu0 %2169, %v2156
    %v2171 = vpop.permute.xlu0 %2170
    %2174 = vset.pattern.permute.xlu0 0
    %2175 = vperm.xlu0 %2174, %v2157
    %v2176 = vpop.permute.xlu0 %2175
    %v2179 = vsel %vm554, %v2150, 0
    %v2182 = vsel %vm554, %v2151, 0
    %v2185 = vsel %vm554, %v2152, 0
    %v2188 = vsel %vm554, %v2153, 0
    %2190 = vmatprep.subr.mxu0 0.0
    %2191 = vmatpush1.msra.mxu0 %v1837
    %2192 = vmatprep.subr.mxu0 0.0
    %2193 = vmatpush1.msra.mxu0 %v1941
    %2194 = vmatprep.subr.mxu0 0.0
    %2195 = vmatpush1.msra.mxu0 %v2045
    %2196 = vmatprep.subr.mxu0 0.0
    %2197 = vmatpush1.msra.mxu0 %v2149
    %2198 = vmatprep.subr.mxu0 0.0
    %2199 = vmatpush1.msra.mxu0 0.0
    %2200 = vmatprep.subr.mxu0 0.0
    %2201 = vmatpush1.msra.mxu0 0.0
    %2202 = vmatprep.subr.mxu0 0.0
    %2203 = vmatpush1.msra.mxu0 0.0
    %2204 = vmatprep.subr.mxu0 0.0
    %2205 = vmatpush1.msra.mxu0 0.0
    %2206 = vmatprep.subr.mxu0 0.0
    %2207 = vmatpush1.msra.mxu0 0.0
    %2208 = vmatprep.subr.mxu0 0.0
    %2209 = vmatpush1.msra.mxu0 0.0
    %2210 = vmatprep.subr.mxu0 0.0
    %2211 = vmatpush1.msra.mxu0 0.0
    %2212 = vmatprep.subr.mxu0 0.0
    %2213 = vmatpush1.msra.mxu0 0.0
    %2214 = vmatprep.subr.mxu0 0.0
    %2215 = vmatpush1.msra.mxu0 0.0
    %2216 = vmatprep.subr.mxu0 0.0
    %2217 = vmatpush1.msra.mxu0 0.0
    %2218 = vmatprep.subr.mxu0 0.0
    %2219 = vmatpush1.msra.mxu0 0.0
    %2220 = vmatprep.subr.mxu0 0.0
    %2221 = vmatpush1.msra.mxu0 0.0
    %2222 = vmatprep.subr.mxu0 0.0
    %2223 = vmatpush1.msra.mxu0 0.0
    %2224 = vmatprep.subr.mxu0 0.0
    %2225 = vmatpush1.msra.mxu0 0.0
    %2226 = vmatprep.subr.mxu0 0.0
    %2227 = vmatpush1.msra.mxu0 0.0
    %2228 = vmatprep.subr.mxu0 0.0
    %2229 = vmatpush1.msra.mxu0 0.0
    %2230 = vmatprep.subr.mxu0 0.0
    %2231 = vmatpush1.msra.mxu0 0.0
    %2232 = vmatprep.subr.mxu0 0.0
    %2233 = vmatpush1.msra.mxu0 0.0
    %2234 = vmatprep.subr.mxu0 0.0
    %2235 = vmatpush1.msra.mxu0 0.0
    %2236 = vmatprep.subr.mxu0 0.0
    %2237 = vmatpush1.msra.mxu0 0.0
    %2238 = vmatprep.subr.mxu0 0.0
    %2239 = vmatpush1.msra.mxu0 0.0
    %2240 = vmatprep.subr.mxu0 0.0
    %2241 = vmatpush1.msra.mxu0 0.0
    %2242 = vmatprep.subr.mxu0 0.0
    %2243 = vmatpush1.msra.mxu0 0.0
    %2244 = vmatprep.subr.mxu0 0.0
    %2245 = vmatpush1.msra.mxu0 0.0
    %2246 = vmatprep.subr.mxu0 0.0
    %2247 = vmatpush1.msra.mxu0 0.0
    %2248 = vmatprep.subr.mxu0 0.0
    %2249 = vmatpush1.msra.mxu0 0.0
    %2250 = vmatprep.subr.mxu0 0.0
    %2251 = vmatpush1.msra.mxu0 0.0
    %2252 = vmatprep.subr.mxu0 0.0
    %2253 = vmatpush1.msra.mxu0 0.0
    %2254 = vmatprep.mubr.f32.mxu0 0.0
    %2255 = vmatmul.mubr.f32.gmra.mrb[0].mxu0 %v2179
    %v2256 = vpop.f32.mrb[0].mxu0
    %v2257 = vadd.f32 %v2161, %v2256
    %v2258 = vpop.f32.mrb[0].mxu0
    %2259 = vmatprep.mubr.f32.mxu0 0.0
    %2260 = vmatmul.mubr.f32.gmra.mrb[0].mxu0 %v2182
    %v2261 = vpop.f32.mrb[0].mxu0
    %v2262 = vadd.f32 %v2166, %v2261
    %v2263 = vpop.f32.mrb[0].mxu0
    %2264 = vmatprep.mubr.f32.mxu0 0.0
    %2265 = vmatmul.mubr.f32.gmra.mrb[0].mxu0 %v2185
    %v2266 = vpop.f32.mrb[0].mxu0
    %v2267 = vadd.f32 %v2171, %v2266
    %v2268 = vpop.f32.mrb[0].mxu0
    %2269 = vmatprep.mubr.f32.mxu0 0.0
    %2270 = vmatmul.mubr.f32.gmra.mrb[0].mxu0 %v2188
    %v2271 = vpop.f32.mrb[0].mxu0
    %v2272 = vadd.f32 %v2176, %v2271
    %v2273 = vpop.f32.mrb[0].mxu0
    %2274 = vdwg.mxu0
    %v2275 = vand.u32 2147483647, %v2257
    %vm2276 = vcmp.le.f32.partialorder %v2275, 0.7853982
    %vm2277 = vcmp.lt.s32.totalorder %v2257, 0
    %v2278 = vand.u32 %v2257, 2139095040
    %v2279 = vshrl.u32 %v2278, 23
    %v2280 = vsub.s32 %v2279, 127
    %v2281 = vand.u32 2147483647, %v2257
    %v2282 = vand.u32 %v2281, 8388607
    %v2283 = vor.u32 %v2282, 8388608
    %v2284 = vsub.s32 0, %v2283
    %v2285 = vadd.s32 %v2280, 1
    %vm2286 = vcmp.gt.s32.totalorder %v2285, 0
    %v2287 = vsel %vm2286, %v2285, 0
    %v2288 = vshrl.u32 %v2287, 5
    %v2289 = vand.u32 %v2287, 31
    %v2290 = vsub.s32 32, %v2289
    %v2291 = vshrl.u32 683565275, %v2290
    %v2292 = vshll.u32 683565275, %v2289
    %v2293 = vshrl.u32 2475754826, %v2290
    %v2294 = vor.u32 %v2292, %v2293
    %v2295 = vshll.u32 2475754826, %v2289
    %v2296 = vshrl.u32 2131351028, %v2290
    %v2297 = vor.u32 %v2295, %v2296
    %v2298 = vshll.u32 2131351028, %v2289
    %v2299 = vshrl.u32 2102212464, %v2290
    %v2300 = vor.u32 %v2298, %v2299
    %v2301 = vshll.u32 2102212464, %v2289
    %v2302 = vshrl.u32 920167782, %v2290
    %v2303 = vor.u32 %v2301, %v2302
    %v2304 = vshll.u32 920167782, %v2289
    %v2305 = vshrl.u32 1326507024, %v2290
    %v2306 = vor.u32 %v2304, %v2305
    %vm2307 = vcmp.lt.s32.totalorder %v2288, 1
    %vm2308 = vcmp.lt.s32.totalorder %v2288, 2
    %vm2309 = vcmp.lt.s32.totalorder %v2288, 3
    %vm2310 = vcmp.lt.s32.totalorder %v2288, 4
    %v2311 = vsel %vm2307, %v2291, %v2294
    %v2312 = vsel %vm2310, %v2300, 2102212464
    %v2313 = vsel %vm2309, %v2297, %v2312
    %v2314 = vsel %vm2308, %v2311, %v2313
    %v2315 = vsel %vm2307, %v2294, %v2297
    %v2316 = vsel %vm2310, %v2303, 920167782
    %v2317 = vsel %vm2309, %v2300, %v2316
    %v2318 = vsel %vm2308, %v2315, %v2317
    %v2319 = vsel %vm2307, %v2297, %v2300
    %v2320 = vsel %vm2310, %v2306, 1326507024
    %v2321 = vsel %vm2309, %v2303, %v2320
    %v2322 = vsel %vm2308, %v2319, %v2321
    %v2323 = vshll.u32 %v2283, 8
    %v2324 = vmul.u32.u64.compose %v2323, %v2322
    %v2325 = vextract.low.u32 %v2324
    %v2326 = vextract.high.u32 %v2324
    %v2327 = vmul.u32.u64.compose %v2323, %v2318
    %v2328 = vextract.low.u32 %v2327
    %v2329 = vextract.high.u32 %v2327
    %v2330 = vmul.u32 %v2323, %v2314
    %v2331 = vadd.s32 %v2326, %v2328
    %vm2332 = vc.u32 %v2326, %v2328
    %v2333 = vadd.s32 %v2329, 1
    %v2334 = vsel %vm2332, %v2333, %v2329
    %v2335 = vadd.s32 %v2330, %v2334
    %v2336 = vadd.s32 %v2335, 536870912
    %v2337 = vshrl.u32 %v2336, 30
    %v2338 = vshll.u32 %v2337, 30
    %v2339 = vsub.s32 %v2335, %v2338
    %vm2340 = vcmp.lt.s32.totalorder %v2339, 0
    %v2341 = vsub.s32 0, %v2339
    %v2342 = vsel %vm2340, %v2341, %v2339
    %v2343 = vclz %v2342
    %v2344 = vsub.s32 %v2343, 2
    %vm2345 = vcmp.gt.s32.totalorder 0, %v2344
    %v2346 = vsel %vm2345, 0, %v2344
    %v2347 = vsub.s32 32, %v2346
    %v2348 = vshll.u32 %v2339, %v2346
    %v2349 = vshrl.u32 %v2331, %v2347
    %v2350 = vor.u32 %v2348, %v2349
    %v2351 = vsub.s32 4294967266, %v2346
    %v2352 = vadd.s32 %v2351, 127
    %v2353 = vshll.u32 %v2352, 23
    %v2354 = vor.u32 4788187, %v2353
    %v2355 = vand.u32 2147483647, %v2354
    %v2357 = vcvt.s32.f32 %v2350
    %v2358 = vmul.f32 %v2357, %v2355
    %v2359 = vxor.u32 %v2358, 2147483648
    %v2360 = vsel %vm2277, %v2359, %v2358
    %v2361 = vsub.s32 4, %v2337
    %v2362 = vsel %vm2277, %v2361, %v2337
    %v2363 = vsel %vm2276, %v2257, %v2360
    %v2364 = vsel %vm2276, 0, %v2362
    %v2365 = vcosq.f32.pop %v2363
    %v2366 = vsinq.f32.pop %v2363
    %vm2367 = vweird.f32 %v2257
    %v2368 = vadd.s32 %v2364, 3
    %v2369 = vand.u32 %v2368, 3
    %vm2370 = vcmp.lt.s32.totalorder %v2369, 2
    %vm2371 = vcmp.eq.s32.totalorder %v2369, 0
    %v2372 = vxor.u32 %v2366, 2147483648
    %v2373 = vsel %vm2371, %v2365, %v2372
    %vm2374 = vcmp.eq.s32.totalorder %v2369, 2
    %v2375 = vxor.u32 %v2365, 2147483648
    %v2376 = vsel %vm2374, %v2375, %v2366
    %v2377 = vsel %vm2370, %v2373, %v2376
    %v2378 = vsel %vm2367, nan, %v2377
    %v2379 = vand.u32 2147483647, %v2262
    %vm2380 = vcmp.le.f32.partialorder %v2379, 0.7853982
    %vm2381 = vcmp.lt.s32.totalorder %v2262, 0
    %v2382 = vand.u32 %v2262, 2139095040
    %v2383 = vshrl.u32 %v2382, 23
    %v2384 = vsub.s32 %v2383, 127
    %v2385 = vand.u32 2147483647, %v2262
    %v2386 = vand.u32 %v2385, 8388607
    %v2387 = vor.u32 %v2386, 8388608
    %v2388 = vsub.s32 0, %v2387
    %v2389 = vadd.s32 %v2384, 1
    %vm2390 = vcmp.gt.s32.totalorder %v2389, 0
    %v2391 = vsel %vm2390, %v2389, 0
    %v2392 = vshrl.u32 %v2391, 5
    %v2393 = vand.u32 %v2391, 31
    %v2394 = vsub.s32 32, %v2393
    %v2395 = vshrl.u32 683565275, %v2394
    %v2396 = vshll.u32 683565275, %v2393
    %v2397 = vshrl.u32 2475754826, %v2394
    %v2398 = vor.u32 %v2396, %v2397
    %v2399 = vshll.u32 2475754826, %v2393
    %v2400 = vshrl.u32 2131351028, %v2394
    %v2401 = vor.u32 %v2399, %v2400
    %v2402 = vshll.u32 2131351028, %v2393
    %v2403 = vshrl.u32 2102212464, %v2394
    %v2404 = vor.u32 %v2402, %v2403
    %v2405 = vshll.u32 2102212464, %v2393
    %v2406 = vshrl.u32 920167782, %v2394
    %v2407 = vor.u32 %v2405, %v2406
    %v2408 = vshll.u32 920167782, %v2393
    %v2409 = vshrl.u32 1326507024, %v2394
    %v2410 = vor.u32 %v2408, %v2409
    %vm2411 = vcmp.lt.s32.totalorder %v2392, 1
    %vm2412 = vcmp.lt.s32.totalorder %v2392, 2
    %vm2413 = vcmp.lt.s32.totalorder %v2392, 3
    %vm2414 = vcmp.lt.s32.totalorder %v2392, 4
    %v2415 = vsel %vm2411, %v2395, %v2398
    %v2416 = vsel %vm2414, %v2404, 2102212464
    %v2417 = vsel %vm2413, %v2401, %v2416
    %v2418 = vsel %vm2412, %v2415, %v2417
    %v2419 = vsel %vm2411, %v2398, %v2401
    %v2420 = vsel %vm2414, %v2407, 920167782
    %v2421 = vsel %vm2413, %v2404, %v2420
    %v2422 = vsel %vm2412, %v2419, %v2421
    %v2423 = vsel %vm2411, %v2401, %v2404
    %v2424 = vsel %vm2414, %v2410, 1326507024
    %v2425 = vsel %vm2413, %v2407, %v2424
    %v2426 = vsel %vm2412, %v2423, %v2425
    %v2427 = vshll.u32 %v2387, 8
    %v2428 = vmul.u32.u64.compose %v2427, %v2426
    %v2429 = vextract.low.u32 %v2428
    %v2430 = vextract.high.u32 %v2428
    %v2431 = vmul.u32.u64.compose %v2427, %v2422
    %v2432 = vextract.low.u32 %v2431
    %v2433 = vextract.high.u32 %v2431
    %v2434 = vmul.u32 %v2427, %v2418
    %v2435 = vadd.s32 %v2430, %v2432
    %vm2436 = vc.u32 %v2430, %v2432
    %v2437 = vadd.s32 %v2433, 1
    %v2438 = vsel %vm2436, %v2437, %v2433
    %v2439 = vadd.s32 %v2434, %v2438
    %v2440 = vadd.s32 %v2439, 536870912
    %v2441 = vshrl.u32 %v2440, 30
    %v2442 = vshll.u32 %v2441, 30
    %v2443 = vsub.s32 %v2439, %v2442
    %vm2444 = vcmp.lt.s32.totalorder %v2443, 0
    %v2445 = vsub.s32 0, %v2443
    %v2446 = vsel %vm2444, %v2445, %v2443
    %v2447 = vclz %v2446
    %v2448 = vsub.s32 %v2447, 2
    %vm2449 = vcmp.gt.s32.totalorder 0, %v2448
    %v2450 = vsel %vm2449, 0, %v2448
    %v2451 = vsub.s32 32, %v2450
    %v2452 = vshll.u32 %v2443, %v2450
    %v2453 = vshrl.u32 %v2435, %v2451
    %v2454 = vor.u32 %v2452, %v2453
    %v2455 = vsub.s32 4294967266, %v2450
    %v2456 = vadd.s32 %v2455, 127
    %v2457 = vshll.u32 %v2456, 23
    %v2458 = vor.u32 4788187, %v2457
    %v2459 = vand.u32 2147483647, %v2458
    %v2461 = vcvt.s32.f32 %v2454
    %v2462 = vmul.f32 %v2461, %v2459
    %v2463 = vxor.u32 %v2462, 2147483648
    %v2464 = vsel %vm2381, %v2463, %v2462
    %v2465 = vsub.s32 4, %v2441
    %v2466 = vsel %vm2381, %v2465, %v2441
    %v2467 = vsel %vm2380, %v2262, %v2464
    %v2468 = vsel %vm2380, 0, %v2466
    %v2469 = vcosq.f32.pop %v2467
    %v2470 = vsinq.f32.pop %v2467
    %vm2471 = vweird.f32 %v2262
    %v2472 = vadd.s32 %v2468, 3
    %v2473 = vand.u32 %v2472, 3
    %vm2474 = vcmp.lt.s32.totalorder %v2473, 2
    %vm2475 = vcmp.eq.s32.totalorder %v2473, 0
    %v2476 = vxor.u32 %v2470, 2147483648
    %v2477 = vsel %vm2475, %v2469, %v2476
    %vm2478 = vcmp.eq.s32.totalorder %v2473, 2
    %v2479 = vxor.u32 %v2469, 2147483648
    %v2480 = vsel %vm2478, %v2479, %v2470
    %v2481 = vsel %vm2474, %v2477, %v2480
    %v2482 = vsel %vm2471, nan, %v2481
    %v2483 = vand.u32 2147483647, %v2267
    %vm2484 = vcmp.le.f32.partialorder %v2483, 0.7853982
    %vm2485 = vcmp.lt.s32.totalorder %v2267, 0
    %v2486 = vand.u32 %v2267, 2139095040
    %v2487 = vshrl.u32 %v2486, 23
    %v2488 = vsub.s32 %v2487, 127
    %v2489 = vand.u32 2147483647, %v2267
    %v2490 = vand.u32 %v2489, 8388607
    %v2491 = vor.u32 %v2490, 8388608
    %v2492 = vsub.s32 0, %v2491
    %v2493 = vadd.s32 %v2488, 1
    %vm2494 = vcmp.gt.s32.totalorder %v2493, 0
    %v2495 = vsel %vm2494, %v2493, 0
    %v2496 = vshrl.u32 %v2495, 5
    %v2497 = vand.u32 %v2495, 31
    %v2498 = vsub.s32 32, %v2497
    %v2499 = vshrl.u32 683565275, %v2498
    %v2500 = vshll.u32 683565275, %v2497
    %v2501 = vshrl.u32 2475754826, %v2498
    %v2502 = vor.u32 %v2500, %v2501
    %v2503 = vshll.u32 2475754826, %v2497
    %v2504 = vshrl.u32 2131351028, %v2498
    %v2505 = vor.u32 %v2503, %v2504
    %v2506 = vshll.u32 2131351028, %v2497
    %v2507 = vshrl.u32 2102212464, %v2498
    %v2508 = vor.u32 %v2506, %v2507
    %v2509 = vshll.u32 2102212464, %v2497
    %v2510 = vshrl.u32 920167782, %v2498
    %v2511 = vor.u32 %v2509, %v2510
    %v2512 = vshll.u32 920167782, %v2497
    %v2513 = vshrl.u32 1326507024, %v2498
    %v2514 = vor.u32 %v2512, %v2513
    %vm2515 = vcmp.lt.s32.totalorder %v2496, 1
    %vm2516 = vcmp.lt.s32.totalorder %v2496, 2
    %vm2517 = vcmp.lt.s32.totalorder %v2496, 3
    %vm2518 = vcmp.lt.s32.totalorder %v2496, 4
    %v2519 = vsel %vm2515, %v2499, %v2502
    %v2520 = vsel %vm2518, %v2508, 2102212464
    %v2521 = vsel %vm2517, %v2505, %v2520
    %v2522 = vsel %vm2516, %v2519, %v2521
    %v2523 = vsel %vm2515, %v2502, %v2505
    %v2524 = vsel %vm2518, %v2511, 920167782
    %v2525 = vsel %vm2517, %v2508, %v2524
    %v2526 = vsel %vm2516, %v2523, %v2525
    %v2527 = vsel %vm2515, %v2505, %v2508
    %v2528 = vsel %vm2518, %v2514, 1326507024
    %v2529 = vsel %vm2517, %v2511, %v2528
    %v2530 = vsel %vm2516, %v2527, %v2529
    %v2531 = vshll.u32 %v2491, 8
    %v2532 = vmul.u32.u64.compose %v2531, %v2530
    %v2533 = vextract.low.u32 %v2532
    %v2534 = vextract.high.u32 %v2532
    %v2535 = vmul.u32.u64.compose %v2531, %v2526
    %v2536 = vextract.low.u32 %v2535
    %v2537 = vextract.high.u32 %v2535
    %v2538 = vmul.u32 %v2531, %v2522
    %v2539 = vadd.s32 %v2534, %v2536
    %vm2540 = vc.u32 %v2534, %v2536
    %v2541 = vadd.s32 %v2537, 1
    %v2542 = vsel %vm2540, %v2541, %v2537
    %v2543 = vadd.s32 %v2538, %v2542
    %v2544 = vadd.s32 %v2543, 536870912
    %v2545 = vshrl.u32 %v2544, 30
    %v2546 = vshll.u32 %v2545, 30
    %v2547 = vsub.s32 %v2543, %v2546
    %vm2548 = vcmp.lt.s32.totalorder %v2547, 0
    %v2549 = vsub.s32 0, %v2547
    %v2550 = vsel %vm2548, %v2549, %v2547
    %v2551 = vclz %v2550
    %v2552 = vsub.s32 %v2551, 2
    %vm2553 = vcmp.gt.s32.totalorder 0, %v2552
    %v2554 = vsel %vm2553, 0, %v2552
    %v2555 = vsub.s32 32, %v2554
    %v2556 = vshll.u32 %v2547, %v2554
    %v2557 = vshrl.u32 %v2539, %v2555
    %v2558 = vor.u32 %v2556, %v2557
    %v2559 = vsub.s32 4294967266, %v2554
    %v2560 = vadd.s32 %v2559, 127
    %v2561 = vshll.u32 %v2560, 23
    %v2562 = vor.u32 4788187, %v2561
    %v2563 = vand.u32 2147483647, %v2562
    %v2565 = vcvt.s32.f32 %v2558
    %v2566 = vmul.f32 %v2565, %v2563
    %v2567 = vxor.u32 %v2566, 2147483648
    %v2568 = vsel %vm2485, %v2567, %v2566
    %v2569 = vsub.s32 4, %v2545
    %v2570 = vsel %vm2485, %v2569, %v2545
    %v2571 = vsel %vm2484, %v2267, %v2568
    %v2572 = vsel %vm2484, 0, %v2570
    %v2573 = vcosq.f32.pop %v2571
    %v2574 = vsinq.f32.pop %v2571
    %vm2575 = vweird.f32 %v2267
    %v2576 = vadd.s32 %v2572, 3
    %v2577 = vand.u32 %v2576, 3
    %vm2578 = vcmp.lt.s32.totalorder %v2577, 2
    %vm2579 = vcmp.eq.s32.totalorder %v2577, 0
    %v2580 = vxor.u32 %v2574, 2147483648
    %v2581 = vsel %vm2579, %v2573, %v2580
    %vm2582 = vcmp.eq.s32.totalorder %v2577, 2
    %v2583 = vxor.u32 %v2573, 2147483648
    %v2584 = vsel %vm2582, %v2583, %v2574
    %v2585 = vsel %vm2578, %v2581, %v2584
    %v2586 = vsel %vm2575, nan, %v2585
    %v2587 = vand.u32 2147483647, %v2272
    %vm2588 = vcmp.le.f32.partialorder %v2587, 0.7853982
    %vm2589 = vcmp.lt.s32.totalorder %v2272, 0
    %v2590 = vand.u32 %v2272, 2139095040
    %v2591 = vshrl.u32 %v2590, 23
    %v2592 = vsub.s32 %v2591, 127
    %v2593 = vand.u32 2147483647, %v2272
    %v2594 = vand.u32 %v2593, 8388607
    %v2595 = vor.u32 %v2594, 8388608
    %v2596 = vsub.s32 0, %v2595
    %v2597 = vadd.s32 %v2592, 1
    %vm2598 = vcmp.gt.s32.totalorder %v2597, 0
    %v2599 = vsel %vm2598, %v2597, 0
    %v2600 = vshrl.u32 %v2599, 5
    %v2601 = vand.u32 %v2599, 31
    %v2602 = vsub.s32 32, %v2601
    %v2603 = vshrl.u32 683565275, %v2602
    %v2604 = vshll.u32 683565275, %v2601
    %v2605 = vshrl.u32 2475754826, %v2602
    %v2606 = vor.u32 %v2604, %v2605
    %v2607 = vshll.u32 2475754826, %v2601
    %v2608 = vshrl.u32 2131351028, %v2602
    %v2609 = vor.u32 %v2607, %v2608
    %v2610 = vshll.u32 2131351028, %v2601
    %v2611 = vshrl.u32 2102212464, %v2602
    %v2612 = vor.u32 %v2610, %v2611
    %v2613 = vshll.u32 2102212464, %v2601
    %v2614 = vshrl.u32 920167782, %v2602
    %v2615 = vor.u32 %v2613, %v2614
    %v2616 = vshll.u32 920167782, %v2601
    %v2617 = vshrl.u32 1326507024, %v2602
    %v2618 = vor.u32 %v2616, %v2617
    %vm2619 = vcmp.lt.s32.totalorder %v2600, 1
    %vm2620 = vcmp.lt.s32.totalorder %v2600, 2
    %vm2621 = vcmp.lt.s32.totalorder %v2600, 3
    %vm2622 = vcmp.lt.s32.totalorder %v2600, 4
    %v2623 = vsel %vm2619, %v2603, %v2606
    %v2624 = vsel %vm2622, %v2612, 2102212464
    %v2625 = vsel %vm2621, %v2609, %v2624
    %v2626 = vsel %vm2620, %v2623, %v2625
    %v2627 = vsel %vm2619, %v2606, %v2609
    %v2628 = vsel %vm2622, %v2615, 920167782
    %v2629 = vsel %vm2621, %v2612, %v2628
    %v2630 = vsel %vm2620, %v2627, %v2629
    %v2631 = vsel %vm2619, %v2609, %v2612
    %v2632 = vsel %vm2622, %v2618, 1326507024
    %v2633 = vsel %vm2621, %v2615, %v2632
    %v2634 = vsel %vm2620, %v2631, %v2633
    %v2635 = vshll.u32 %v2595, 8
    %v2636 = vmul.u32.u64.compose %v2635, %v2634
    %v2637 = vextract.low.u32 %v2636
    %v2638 = vextract.high.u32 %v2636
    %v2639 = vmul.u32.u64.compose %v2635, %v2630
    %v2640 = vextract.low.u32 %v2639
    %v2641 = vextract.high.u32 %v2639
    %v2642 = vmul.u32 %v2635, %v2626
    %v2643 = vadd.s32 %v2638, %v2640
    %vm2644 = vc.u32 %v2638, %v2640
    %v2645 = vadd.s32 %v2641, 1
    %v2646 = vsel %vm2644, %v2645, %v2641
    %v2647 = vadd.s32 %v2642, %v2646
    %v2648 = vadd.s32 %v2647, 536870912
    %v2649 = vshrl.u32 %v2648, 30
    %v2650 = vshll.u32 %v2649, 30
    %v2651 = vsub.s32 %v2647, %v2650
    %vm2652 = vcmp.lt.s32.totalorder %v2651, 0
    %v2653 = vsub.s32 0, %v2651
    %v2654 = vsel %vm2652, %v2653, %v2651
    %v2655 = vclz %v2654
    %v2656 = vsub.s32 %v2655, 2
    %vm2657 = vcmp.gt.s32.totalorder 0, %v2656
    %v2658 = vsel %vm2657, 0, %v2656
    %v2659 = vsub.s32 32, %v2658
    %v2660 = vshll.u32 %v2651, %v2658
    %v2661 = vshrl.u32 %v2643, %v2659
    %v2662 = vor.u32 %v2660, %v2661
    %v2663 = vsub.s32 4294967266, %v2658
    %v2664 = vadd.s32 %v2663, 127
    %v2665 = vshll.u32 %v2664, 23
    %v2666 = vor.u32 4788187, %v2665
    %v2667 = vand.u32 2147483647, %v2666
    %v2669 = vcvt.s32.f32 %v2662
    %v2670 = vmul.f32 %v2669, %v2667
    %v2671 = vxor.u32 %v2670, 2147483648
    %v2672 = vsel %vm2589, %v2671, %v2670
    %v2673 = vsub.s32 4, %v2649
    %v2674 = vsel %vm2589, %v2673, %v2649
    %v2675 = vsel %vm2588, %v2272, %v2672
    %v2676 = vsel %vm2588, 0, %v2674
    %v2677 = vcosq.f32.pop %v2675
    %v2678 = vsinq.f32.pop %v2675
    %vm2679 = vweird.f32 %v2272
    %v2680 = vadd.s32 %v2676, 3
    %v2681 = vand.u32 %v2680, 3
    %vm2682 = vcmp.lt.s32.totalorder %v2681, 2
    %vm2683 = vcmp.eq.s32.totalorder %v2681, 0
    %v2684 = vxor.u32 %v2678, 2147483648
    %v2685 = vsel %vm2683, %v2677, %v2684
    %vm2686 = vcmp.eq.s32.totalorder %v2681, 2
    %v2687 = vxor.u32 %v2677, 2147483648
    %v2688 = vsel %vm2686, %v2687, %v2678
    %v2689 = vsel %vm2682, %v2685, %v2688
    %v2690 = vsel %vm2679, nan, %v2689
    %v2691 = vld [vmem:[%s11] sm:$0xff]
    %v2692 = vld [vmem:[%s11 + $0x8] sm:$0xff]
    %v2693 = vld [vmem:[%s11 + $0x10] sm:$0xff]
    %v2694 = vld [vmem:[%s11 + $0x18] sm:$0xff]
    %2696 = vset.pattern.permute.xlu0 0
    %2697 = vperm.xlu0 %2696, %v2691
    %v2698 = vpop.permute.xlu0 %2697
    %2701 = vset.pattern.permute.xlu0 0
    %2702 = vperm.xlu0 %2701, %v2692
    %v2703 = vpop.permute.xlu0 %2702
    %2706 = vset.pattern.permute.xlu0 0
    %2707 = vperm.xlu0 %2706, %v2693
    %v2708 = vpop.permute.xlu0 %2707
    %2711 = vset.pattern.permute.xlu0 0
    %2712 = vperm.xlu0 %2711, %v2694
    %v2713 = vpop.permute.xlu0 %2712
    %v2715 = vmul.f32 %v2698, %v2378
    %v2716 = vmul.f32 %v2703, %v2482
    %v2717 = vmul.f32 %v2708, %v2586
    %v2718 = vmul.f32 %v2713, %v2690
    %vm2719 = vcmask 523264
    %v2720 = vsel %vm2719, %v2715, 0.0
    %v2721 = vsel %vm2719, %v2716, 0.0
    %v2722 = vadd.f32 %v2720, %v2721
    %v2723 = vsel %vm2719, %v2717, 0.0
    %v2724 = vadd.f32 %v2722, %v2723
    %v2725 = vsel %vm2719, %v2718, 0.0
    %v2726 = vadd.f32 %v2724, %v2725
    %v2727 = vrot.slane %v2726, 4
    %v2728 = vadd.f32 %v2726, %v2727
    %v2729 = vrot.slane %v2728, 2
    %v2730 = vadd.f32 %v2728, %v2729
    %v2731 = vrot.slane %v2730, 1
    %v2732 = vadd.f32 %v2730, %v2731
    %v2733 = vld [vmem:[#allocation2] sm:$0x1]
    %2735 = vset.pattern.permute.xlu0 0
    %2736 = vperm.xlu0 %2735, %v2733
    %v2737 = vpop.permute.xlu0 %2736
    %v2739 = vlaneseq
    %v2740 = vshrl.u32 %v2739, 7
    %v2741 = vsub.s32 0, %v2740
    %v2742 = vrot.slane %v2737, %v2741
    %v2743 = vadd.f32 %v2732, %v2742
    %vm2744 = vcmask 516096
    %2745 = vst.msk [vmem:[#allocation3] sm:$0x1] %vm2744, %v2743
    // Predicated region
    $region54: #{tpu_custom_call.1} parent=1 // pred_check
      _
    $region55: #{tpu_custom_call.1} parent=1 // pred_check_branch
      %2747 = sbr.rel (0) target = $region57
    $region56: #{tpu_custom_call.1} parent=1 // pred_region
      %s2749 = ssub.s32 16, 16
      %2750 = vsyncadd [#allocation4], %s2749
      %s2752 = sshll.u32 [#allocation3], 4
      %s2753 = int_to_ptr.vmem [resolvable:$true] %s2752
      %2755 = dma.vmem_to_hbm [thread:$0]  %s2753, 16, %s13, [#allocation4]
    $region57: #{tpu_custom_call.1} parent=1 // pred_fallthru
      _
    // Predicated region
    $region58: #{tpu_custom_call.1} parent=1 // pred_check
      _
    $region59: #{tpu_custom_call.1} parent=1 // pred_check_branch
      %2757 = sbr.rel (0) target = $region61
    $region60: #{tpu_custom_call.1} parent=1 // pred_region
      %2758 = dma.done [#allocation4], 16
    $region61: #{tpu_custom_call.1} parent=1 // pred_fallthru
      _
    %2759 = vsyncpa [#allocation4], 1

</llo_original>
